<compile_context>
chip_gen: v6e
topology: v6e:2x2x1
jax: 0.10.0
libtpu: 0.0.40
codegen_flags: <defaults>
</compile_context>

<pallas_src>
import functools
import math

import jax
import jax.numpy as jnp
from jax import lax
from jax.experimental import pallas as pl
from jax.experimental.pallas import tpu as pltpu

F32 = jnp.float32
BF16 = jnp.bfloat16


def _ln(x, g, b, eps):
    """LayerNorm over the last axis, f32 math."""
    mu = jnp.mean(x, axis=-1, keepdims=True)
    xc = x - mu
    var = jnp.mean(xc * xc, axis=-1, keepdims=True)
    return xc * lax.rsqrt(var + eps) * g + b


def _encoder_layer_kernel(x_ref, wqkv_ref, bqkv_ref, wo_ref, bo_ref,
                          g1_ref, be1_ref, w1_ref, b1_ref, w2_ref, b2_ref,
                          g2_ref, be2_ref, o_ref, *, b_blk, nhead, eps):
    """Full post-norm transformer encoder layer for a block of batch elements.

    Grid axis 0 = batch blocks, marked "parallel".  All row-wise matmuls are
    done on the flattened (b_blk*T, D) slab; only the per-(batch, head) (T, T)
    score/context matmuls remain in a small static loop.
    """
    T, D = x_ref.shape[1], x_ref.shape[2]
    hd = D // nhead
    rows = b_blk * T
    scale = 1.0 / math.sqrt(hd)

    x = x_ref[...].reshape(rows, D)                 # (rows, D) f32
    xb = x.astype(BF16)

    # ---- fused QKV projection: one (rows, D) x (D, 3D) matmul ----------------
    qkv = jnp.dot(xb, wqkv_ref[...], preferred_element_type=F32) + bqkv_ref[...]
    qkv_b = qkv.astype(BF16)                        # single cast point for q/k/v

    # ---- multi-head self-attention -------------------------------------------
    # Per-(batch, head) (T, T) matmuls; contexts gathered into one (rows, D)
    # slab so the output projection is a single K=D matmul after the loop.
    ctx_rows = []
    for b in range(b_blk):                          # static, b_blk is small
        r0 = b * T
        ctx_heads = []
        for h in range(nhead):                      # static, nhead is tiny
            lo = h * hd
            qh = qkv_b[r0:r0 + T, lo:lo + hd]
            kh = qkv_b[r0:r0 + T, D + lo:D + lo + hd]
            vh = qkv_b[r0:r0 + T, 2 * D + lo:2 * D + lo + hd]
            s = lax.dot_general(qh, kh, (((1,), (1,)), ((), ())),
                                preferred_element_type=F32) * scale   # (T, T) f32
            m = jnp.max(s, axis=-1, keepdims=True)
            p = jnp.exp(s - m)                                        # f32
            a = p * pl.reciprocal(jnp.sum(p, axis=-1, keepdims=True),
                                  approx=True)                        # EUP recip
            ctx_heads.append(jnp.dot(a.astype(BF16), vh,
                                     preferred_element_type=F32))     # (T, hd)
        ctx_rows.append(jnp.concatenate(ctx_heads, axis=-1))          # (T, D)
    ctx = ctx_rows[0] if b_blk == 1 else jnp.concatenate(ctx_rows, axis=0)

    # ---- hoisted output projection: one (rows, D) x (D, D) matmul ------------
    attn = jnp.dot(ctx.astype(BF16), wo_ref[...],
                   preferred_element_type=F32) + bo_ref[...]

    # ---- residual + LayerNorm 1 (PyTorch post-norm) ---------------------------
    h1 = _ln(x + attn, g1_ref[...], be1_ref[...], eps)

    # ---- feed-forward: Linear -> ReLU -> Linear -------------------------------
    hid = jnp.dot(h1.astype(BF16), w1_ref[...],
                  preferred_element_type=F32) + b1_ref[...]
    hid = jnp.maximum(hid, 0.0)
    ff = jnp.dot(hid.astype(BF16), w2_ref[...],
                 preferred_element_type=F32) + b2_ref[...]

    # ---- residual + LayerNorm 2 -----------------------------------------------
    o_ref[...] = _ln(h1 + ff, g2_ref[...], be2_ref[...], eps).reshape(b_blk, T, D)


def _rep_spec(shape):
    """BlockSpec for a block replicated across the whole grid (weights, biases).

    Constant index_map => fetched once; single-buffered (Buffered(1)) so only
    one VMEM copy of each weight is resident instead of the default two.
    """
    nd = len(shape)
    index_map = lambda *_: (0,) * nd
    try:
        return pl.BlockSpec(shape, index_map, pipeline_mode=pl.Buffered(1))
    except TypeError:
        # Older Pallas builds without BlockSpec.pipeline_mode: fall back to the
        # default (double-buffered) spec — correctness identical.
        return pl.BlockSpec(shape, index_map)


def _choose_b_blk(B, T, D, dff, act_vmem_budget=24 << 20):
    """Largest divisor of B whose activation block fits the budget while
    keeping grid length >= 2 (so the parallel axis spans both v7x cores)."""
    per_b = T * (6 * 4 * D + 3 * D * 6 + dff * 6) + 2 * T * T * 8  # rough bytes
    cap = max(1, int(act_vmem_budget // max(per_b, 1)))
    limit = max(1, min(cap, B // 2 if B >= 2 else 1))
    b_blk = 1
    for d in range(1, limit + 1):
        if B % d == 0:
            b_blk = d
    return b_blk


def spiking_transformer_block(x, params, *, nhead, eps=1e-5):
    """x: (B, T, D) f32 -> (B, T, D) f32.  Equivalent to
    nn.TransformerEncoder(nn.TransformerEncoderLayer(D, nhead, 4*D,
    batch_first=True), num_layers=1) in eval mode (dropout = identity)."""
    B, T, D = x.shape
    assert D % nhead == 0
    dff = params['w1'].shape[1]
    hd = D // nhead

    b_blk = _choose_b_blk(B, T, D, dff)
    grid = (B // b_blk,)

    args = (
        x.astype(F32),
        params['w_qkv'].astype(BF16), params['b_qkv'].reshape(1, 3 * D).astype(F32),
        params['wo'].astype(BF16),    params['bo'].reshape(1, D).astype(F32),
        params['g1'].reshape(1, D).astype(F32), params['be1'].reshape(1, D).astype(F32),
        params['w1'].astype(BF16),    params['b1'].reshape(1, dff).astype(F32),
        params['w2'].astype(BF16),    params['b2'].reshape(1, D).astype(F32),
        params['g2'].reshape(1, D).astype(F32), params['be2'].reshape(1, D).astype(F32),
    )
    in_specs = [pl.BlockSpec((b_blk, T, D), lambda i: (i, 0, 0))] + \
               [_rep_spec(a.shape) for a in args[1:]]
    out_spec = pl.BlockSpec((b_blk, T, D), lambda i: (i, 0, 0))

    # ---- VMEM limit from actual footprint (headroom vs. 64 MiB on v7x) -------
    weight_bytes = sum(int(a.size) * a.dtype.itemsize for a in args[1:])
    act_bytes = b_blk * (T * (6 * 4 * D + 3 * D * 6 + dff * 6) + 2 * T * T * 8)
    io_bytes = 2 * 2 * b_blk * T * D * 4          # double-buffered x / out blocks
    vmem_limit = int(min(max(2 * (weight_bytes + act_bytes + io_bytes), 16 << 20),
                         56 << 20))

    # ---- advisory cost estimate -----------------------------------------------
    flops = int(B * (2 * T * D * 3 * D            # fused QKV
                     + 4 * T * T * D              # scores + context (all heads)
                     + 2 * T * D * D              # output projection
                     + 2 * 2 * T * D * dff))      # FFN
    transcendentals = int(B * (nhead * T * T + nhead * T + 2 * T))
    bytes_accessed = int(weight_bytes + 2 * B * T * D * 4)

    return pl.pallas_call(
        functools.partial(_encoder_layer_kernel, b_blk=b_blk, nhead=nhead, eps=eps),
        out_shape=jax.ShapeDtypeStruct((B, T, D), F32),
        grid_spec=pltpu.PrefetchScalarGridSpec(
            num_scalar_prefetch=0,
            grid=grid,
            in_specs=in_specs,
            out_specs=out_spec,
        ),
        compiler_params=pltpu.CompilerParams(
            dimension_semantics=("parallel",),
            vmem_limit_bytes=vmem_limit),
        cost_estimate=pl.CostEstimate(flops=flops,
                                      transcendentals=transcendentals,
                                      bytes_accessed=bytes_accessed),
    )(*args)


# -----------------------------------------------------------------------------
# Parameter construction + pure-JAX f32 reference (mirrors PyTorch semantics)
# -----------------------------------------------------------------------------

def make_params(key, d_model, dff):
    keys = jax.random.split(key, 4)

    def lin(k, fan_in, shape):
        bound = 1.0 / math.sqrt(fan_in)
        kw, kb = jax.random.split(k)
        return (jax.random.uniform(kw, shape, F32, -bound, bound),
                jax.random.uniform(kb, (shape[1],), F32, -bound, bound))

    w_qkv, b_qkv = lin(keys[0], d_model, (d_model, 3 * d_model))
    wo, bo = lin(keys[1], d_model, (d_model, d_model))
    w1, b1 = lin(keys[2], d_model, (d_model, dff))
    w2, b2 = lin(keys[3], dff, (dff, d_model))
    return dict(w_qkv=w_qkv, b_qkv=b_qkv, wo=wo, bo=bo,
                g1=jnp.ones((d_model,), F32), be1=jnp.zeros((d_model,), F32),
                w1=w1, b1=b1, w2=w2, b2=b2,
                g2=jnp.ones((d_model,), F32), be2=jnp.zeros((d_model,), F32))


def ref_forward(x, p, nhead, eps=1e-5):
    """Pure f32 JAX reference of the PyTorch TransformerEncoderLayer (eval)."""
    B, T, D = x.shape
    hd = D // nhead
    qkv = x @ p['w_qkv'] + p['b_qkv']
    q, k, v = qkv[..., :D], qkv[..., D:2 * D], qkv[..., 2 * D:]

    def heads(t):
        return t.reshape(B, T, nhead, hd).transpose(0, 2, 1, 3)

    q, k, v = heads(q), heads(k), heads(v)
    s = jnp.einsum('bhqd,bhkd->bhqk', q, k) / math.sqrt(hd)
    a = jax.nn.softmax(s, axis=-1)
    ctx = jnp.einsum('bhqk,bhkd->bhqd', a, v).transpose(0, 2, 1, 3).reshape(B, T, D)
    attn = ctx @ p['wo'] + p['bo']

    def ln(y, g, b):
        mu = y.mean(-1, keepdims=True)
        var = ((y - mu) ** 2).mean(-1, keepdims=True)
        return (y - mu) / jnp.sqrt(var + eps) * g + b

    h1 = ln(x + attn, p['g1'], p['be1'])
    ff = jnp.maximum(h1 @ p['w1'] + p['b1'], 0.0) @ p['w2'] + p['b2']
    return ln(h1 + ff, p['g2'], p['be2'])


# -----------------------------------------------------------------------------
if __name__ == "__main__":
    T, D, NHEAD = 8, 32, 4
    key = jax.random.PRNGKey(0)
    kx, kp = jax.random.split(key)
    params = make_params(kp, D, 4 * D)

    fwd = jax.jit(functools.partial(spiking_transformer_block, nhead=NHEAD))

    # B=4 exercises batch-blocking (B_blk=2, grid=2); B=2 the B_blk=1 path.
    for B in (4, 2):
        x = jax.random.normal(jax.random.fold_in(kx, B), (B, T, D), F32)
        out = jax.block_until_ready(fwd(x, params))

        assert out.shape == (B, T, D)
        assert bool(jnp.all(jnp.isfinite(out)))

        # Numerical sanity vs. the f32 reference (kernel uses bf16 MXU operands
        # and an approximate EUP reciprocal, so the tolerance is loose but
        # structure-revealing).
        ref = ref_forward(x, params, NHEAD)
        err = float(jnp.max(jnp.abs(out - ref)))
        assert err < 1e-1, f"B={B}: max abs error vs reference too large: {err}"

    print("KERNEL_OK")
</pallas_src>

<mosaic_0001>
module attributes {stable_mosaic.version = 11 : i64} {
  func.func @_encoder_layer_kernel(%arg0: i32, %arg1: memref<2x8x32xf32, #tpu.memory_space<vmem>>, %arg2: memref<32x96xbf16, #tpu.memory_space<vmem>>, %arg3: memref<1x96xf32, #tpu.memory_space<vmem>>, %arg4: memref<32x32xbf16, #tpu.memory_space<vmem>>, %arg5: memref<1x32xf32, #tpu.memory_space<vmem>>, %arg6: memref<1x32xf32, #tpu.memory_space<vmem>>, %arg7: memref<1x32xf32, #tpu.memory_space<vmem>>, %arg8: memref<32x128xbf16, #tpu.memory_space<vmem>>, %arg9: memref<1x128xf32, #tpu.memory_space<vmem>>, %arg10: memref<128x32xbf16, #tpu.memory_space<vmem>>, %arg11: memref<1x32xf32, #tpu.memory_space<vmem>>, %arg12: memref<1x32xf32, #tpu.memory_space<vmem>>, %arg13: memref<1x32xf32, #tpu.memory_space<vmem>>, %arg14: memref<2x8x32xf32, #tpu.memory_space<vmem>>) attributes {dimension_semantics = [#tpu.dimension_semantics<parallel>], iteration_bounds = array<i64: 2>, scalar_prefetch = 0 : i64, scratch_operands = 0 : i64, tpu.core_type = #tpu.core_type<tc>, window_params = [{transform_indices = @transform_0, window_bounds = array<i64: 2, 8, 32>}, {pipeline_mode = #tpu.pipeline_mode<synchronous>, transform_indices = @transform_1, window_bounds = array<i64: 32, 96>}, {pipeline_mode = #tpu.pipeline_mode<synchronous>, transform_indices = @transform_2, window_bounds = array<i64: 1, 96>}, {pipeline_mode = #tpu.pipeline_mode<synchronous>, transform_indices = @transform_3, window_bounds = array<i64: 32, 32>}, {pipeline_mode = #tpu.pipeline_mode<synchronous>, transform_indices = @transform_4, window_bounds = array<i64: 1, 32>}, {pipeline_mode = #tpu.pipeline_mode<synchronous>, transform_indices = @transform_5, window_bounds = array<i64: 1, 32>}, {pipeline_mode = #tpu.pipeline_mode<synchronous>, transform_indices = @transform_6, window_bounds = array<i64: 1, 32>}, {pipeline_mode = #tpu.pipeline_mode<synchronous>, transform_indices = @transform_7, window_bounds = array<i64: 32, 128>}, {pipeline_mode = #tpu.pipeline_mode<synchronous>, transform_indices = @transform_8, window_bounds = array<i64: 1, 128>}, {pipeline_mode = #tpu.pipeline_mode<synchronous>, transform_indices = @transform_9, window_bounds = array<i64: 128, 32>}, {pipeline_mode = #tpu.pipeline_mode<synchronous>, transform_indices = @transform_10, window_bounds = array<i64: 1, 32>}, {pipeline_mode = #tpu.pipeline_mode<synchronous>, transform_indices = @transform_11, window_bounds = array<i64: 1, 32>}, {pipeline_mode = #tpu.pipeline_mode<synchronous>, transform_indices = @transform_12, window_bounds = array<i64: 1, 32>}, {transform_indices = @transform_13, window_bounds = array<i64: 2, 8, 32>}]} {
    %c0 = arith.constant 0 : index
    %c0_0 = arith.constant 0 : index
    %c0_1 = arith.constant 0 : index
    %0 = vector.load %arg1[%c0, %c0_0, %c0_1] : memref<2x8x32xf32, #tpu.memory_space<vmem>>, vector<2x8x32xf32>
    %1 = vector.shape_cast %0 : vector<2x8x32xf32> to vector<16x32xf32>
    %2 = arith.truncf %1 : vector<16x32xf32> to vector<16x32xbf16>
    %c0_2 = arith.constant 0 : index
    %c0_3 = arith.constant 0 : index
    %3 = vector.load %arg2[%c0_2, %c0_3] : memref<32x96xbf16, #tpu.memory_space<vmem>>, vector<32x96xbf16>
    %cst = arith.constant dense<0.000000e+00> : vector<16x96xf32>
    %4 = tpu.matmul %2, %3, %cst {dimension_numbers = #tpu.dot_dimension_numbers<[1], [0], [0], [1], [0, 0, 1, 1], [], []>} : vector<16x32xbf16>, vector<32x96xbf16>, vector<16x96xf32> -> vector<16x96xf32>
    %c0_4 = arith.constant 0 : index
    %c0_5 = arith.constant 0 : index
    %5 = vector.load %arg3[%c0_4, %c0_5] : memref<1x96xf32, #tpu.memory_space<vmem>>, vector<1x96xf32>
    %6 = vector.broadcast %5 : vector<1x96xf32> to vector<16x96xf32>
    %7 = arith.addf %4, %6 : vector<16x96xf32>
    %8 = arith.truncf %7 : vector<16x96xf32> to vector<16x96xbf16>
    %9 = vector.extract_strided_slice %8 {offsets = [0, 0], sizes = [8, 8], strides = [1, 1]} : vector<16x96xbf16> to vector<8x8xbf16>
    %10 = vector.extract_strided_slice %8 {offsets = [0, 32], sizes = [8, 8], strides = [1, 1]} : vector<16x96xbf16> to vector<8x8xbf16>
    %11 = vector.extract_strided_slice %8 {offsets = [0, 64], sizes = [8, 8], strides = [1, 1]} : vector<16x96xbf16> to vector<8x8xbf16>
    %cst_6 = arith.constant dense<0.000000e+00> : vector<8x8xf32>
    %12 = tpu.matmul %9, %10, %cst_6 {dimension_numbers = #tpu.dot_dimension_numbers<[1], [1], [0], [0], [0, 0, 1, 0], [], []>} : vector<8x8xbf16>, vector<8x8xbf16>, vector<8x8xf32> -> vector<8x8xf32>
    %cst_7 = arith.constant 0.353553385 : f32
    %13 = vector.broadcast %cst_7 : f32 to vector<8x8xf32>
    %14 = arith.mulf %12, %13 : vector<8x8xf32>
    %cst_8 = arith.constant dense<0xFF800000> : vector<8xf32>
    %15 = vector.multi_reduction <maximumf>, %14, %cst_8 [1] : vector<8x8xf32> to vector<8xf32>
    %16 = vector.shape_cast %15 : vector<8xf32> to vector<8x1xf32>
    %17 = vector.broadcast %16 : vector<8x1xf32> to vector<8x8xf32>
    %18 = arith.subf %14, %17 : vector<8x8xf32>
    %19 = math.exp %18 : vector<8x8xf32>
    %cst_9 = arith.constant dense<0.000000e+00> : vector<8xf32>
    %20 = vector.multi_reduction <add>, %19, %cst_9 [1] : vector<8x8xf32> to vector<8xf32>
    %21 = vector.shape_cast %20 : vector<8xf32> to vector<8x1xf32>
    %22 = tpu.reciprocal %21 {approx = true} : vector<8x1xf32> -> vector<8x1xf32>
    %23 = vector.broadcast %22 : vector<8x1xf32> to vector<8x8xf32>
    %24 = arith.mulf %19, %23 : vector<8x8xf32>
    %25 = arith.truncf %24 : vector<8x8xf32> to vector<8x8xbf16>
    %cst_10 = arith.constant dense<0.000000e+00> : vector<8x8xf32>
    %26 = tpu.matmul %25, %11, %cst_10 {dimension_numbers = #tpu.dot_dimension_numbers<[1], [0], [0], [1], [0, 0, 1, 1], [], []>} : vector<8x8xbf16>, vector<8x8xbf16>, vector<8x8xf32> -> vector<8x8xf32>
    %27 = vector.extract_strided_slice %8 {offsets = [0, 8], sizes = [8, 8], strides = [1, 1]} : vector<16x96xbf16> to vector<8x8xbf16>
    %28 = vector.extract_strided_slice %8 {offsets = [0, 40], sizes = [8, 8], strides = [1, 1]} : vector<16x96xbf16> to vector<8x8xbf16>
    %29 = vector.extract_strided_slice %8 {offsets = [0, 72], sizes = [8, 8], strides = [1, 1]} : vector<16x96xbf16> to vector<8x8xbf16>
    %cst_11 = arith.constant dense<0.000000e+00> : vector<8x8xf32>
    %30 = tpu.matmul %27, %28, %cst_11 {dimension_numbers = #tpu.dot_dimension_numbers<[1], [1], [0], [0], [0, 0, 1, 0], [], []>} : vector<8x8xbf16>, vector<8x8xbf16>, vector<8x8xf32> -> vector<8x8xf32>
    %cst_12 = arith.constant 0.353553385 : f32
    %31 = vector.broadcast %cst_12 : f32 to vector<8x8xf32>
    %32 = arith.mulf %30, %31 : vector<8x8xf32>
    %cst_13 = arith.constant dense<0xFF800000> : vector<8xf32>
    %33 = vector.multi_reduction <maximumf>, %32, %cst_13 [1] : vector<8x8xf32> to vector<8xf32>
    %34 = vector.shape_cast %33 : vector<8xf32> to vector<8x1xf32>
    %35 = vector.broadcast %34 : vector<8x1xf32> to vector<8x8xf32>
    %36 = arith.subf %32, %35 : vector<8x8xf32>
    %37 = math.exp %36 : vector<8x8xf32>
    %cst_14 = arith.constant dense<0.000000e+00> : vector<8xf32>
    %38 = vector.multi_reduction <add>, %37, %cst_14 [1] : vector<8x8xf32> to vector<8xf32>
    %39 = vector.shape_cast %38 : vector<8xf32> to vector<8x1xf32>
    %40 = tpu.reciprocal %39 {approx = true} : vector<8x1xf32> -> vector<8x1xf32>
    %41 = vector.broadcast %40 : vector<8x1xf32> to vector<8x8xf32>
    %42 = arith.mulf %37, %41 : vector<8x8xf32>
    %43 = arith.truncf %42 : vector<8x8xf32> to vector<8x8xbf16>
    %cst_15 = arith.constant dense<0.000000e+00> : vector<8x8xf32>
    %44 = tpu.matmul %43, %29, %cst_15 {dimension_numbers = #tpu.dot_dimension_numbers<[1], [0], [0], [1], [0, 0, 1, 1], [], []>} : vector<8x8xbf16>, vector<8x8xbf16>, vector<8x8xf32> -> vector<8x8xf32>
    %45 = vector.extract_strided_slice %8 {offsets = [0, 16], sizes = [8, 8], strides = [1, 1]} : vector<16x96xbf16> to vector<8x8xbf16>
    %46 = vector.extract_strided_slice %8 {offsets = [0, 48], sizes = [8, 8], strides = [1, 1]} : vector<16x96xbf16> to vector<8x8xbf16>
    %47 = vector.extract_strided_slice %8 {offsets = [0, 80], sizes = [8, 8], strides = [1, 1]} : vector<16x96xbf16> to vector<8x8xbf16>
    %cst_16 = arith.constant dense<0.000000e+00> : vector<8x8xf32>
    %48 = tpu.matmul %45, %46, %cst_16 {dimension_numbers = #tpu.dot_dimension_numbers<[1], [1], [0], [0], [0, 0, 1, 0], [], []>} : vector<8x8xbf16>, vector<8x8xbf16>, vector<8x8xf32> -> vector<8x8xf32>
    %cst_17 = arith.constant 0.353553385 : f32
    %49 = vector.broadcast %cst_17 : f32 to vector<8x8xf32>
    %50 = arith.mulf %48, %49 : vector<8x8xf32>
    %cst_18 = arith.constant dense<0xFF800000> : vector<8xf32>
    %51 = vector.multi_reduction <maximumf>, %50, %cst_18 [1] : vector<8x8xf32> to vector<8xf32>
    %52 = vector.shape_cast %51 : vector<8xf32> to vector<8x1xf32>
    %53 = vector.broadcast %52 : vector<8x1xf32> to vector<8x8xf32>
    %54 = arith.subf %50, %53 : vector<8x8xf32>
    %55 = math.exp %54 : vector<8x8xf32>
    %cst_19 = arith.constant dense<0.000000e+00> : vector<8xf32>
    %56 = vector.multi_reduction <add>, %55, %cst_19 [1] : vector<8x8xf32> to vector<8xf32>
    %57 = vector.shape_cast %56 : vector<8xf32> to vector<8x1xf32>
    %58 = tpu.reciprocal %57 {approx = true} : vector<8x1xf32> -> vector<8x1xf32>
    %59 = vector.broadcast %58 : vector<8x1xf32> to vector<8x8xf32>
    %60 = arith.mulf %55, %59 : vector<8x8xf32>
    %61 = arith.truncf %60 : vector<8x8xf32> to vector<8x8xbf16>
    %cst_20 = arith.constant dense<0.000000e+00> : vector<8x8xf32>
    %62 = tpu.matmul %61, %47, %cst_20 {dimension_numbers = #tpu.dot_dimension_numbers<[1], [0], [0], [1], [0, 0, 1, 1], [], []>} : vector<8x8xbf16>, vector<8x8xbf16>, vector<8x8xf32> -> vector<8x8xf32>
    %63 = vector.extract_strided_slice %8 {offsets = [0, 24], sizes = [8, 8], strides = [1, 1]} : vector<16x96xbf16> to vector<8x8xbf16>
    %64 = vector.extract_strided_slice %8 {offsets = [0, 56], sizes = [8, 8], strides = [1, 1]} : vector<16x96xbf16> to vector<8x8xbf16>
    %65 = vector.extract_strided_slice %8 {offsets = [0, 88], sizes = [8, 8], strides = [1, 1]} : vector<16x96xbf16> to vector<8x8xbf16>
    %cst_21 = arith.constant dense<0.000000e+00> : vector<8x8xf32>
    %66 = tpu.matmul %63, %64, %cst_21 {dimension_numbers = #tpu.dot_dimension_numbers<[1], [1], [0], [0], [0, 0, 1, 0], [], []>} : vector<8x8xbf16>, vector<8x8xbf16>, vector<8x8xf32> -> vector<8x8xf32>
    %cst_22 = arith.constant 0.353553385 : f32
    %67 = vector.broadcast %cst_22 : f32 to vector<8x8xf32>
    %68 = arith.mulf %66, %67 : vector<8x8xf32>
    %cst_23 = arith.constant dense<0xFF800000> : vector<8xf32>
    %69 = vector.multi_reduction <maximumf>, %68, %cst_23 [1] : vector<8x8xf32> to vector<8xf32>
    %70 = vector.shape_cast %69 : vector<8xf32> to vector<8x1xf32>
    %71 = vector.broadcast %70 : vector<8x1xf32> to vector<8x8xf32>
    %72 = arith.subf %68, %71 : vector<8x8xf32>
    %73 = math.exp %72 : vector<8x8xf32>
    %cst_24 = arith.constant dense<0.000000e+00> : vector<8xf32>
    %74 = vector.multi_reduction <add>, %73, %cst_24 [1] : vector<8x8xf32> to vector<8xf32>
    %75 = vector.shape_cast %74 : vector<8xf32> to vector<8x1xf32>
    %76 = tpu.reciprocal %75 {approx = true} : vector<8x1xf32> -> vector<8x1xf32>
    %77 = vector.broadcast %76 : vector<8x1xf32> to vector<8x8xf32>
    %78 = arith.mulf %73, %77 : vector<8x8xf32>
    %79 = arith.truncf %78 : vector<8x8xf32> to vector<8x8xbf16>
    %cst_25 = arith.constant dense<0.000000e+00> : vector<8x8xf32>
    %80 = tpu.matmul %79, %65, %cst_25 {dimension_numbers = #tpu.dot_dimension_numbers<[1], [0], [0], [1], [0, 0, 1, 1], [], []>} : vector<8x8xbf16>, vector<8x8xbf16>, vector<8x8xf32> -> vector<8x8xf32>
    %81 = tpu.concatenate %26, %44, %62, %80 in 1 : vector<8x8xf32>, vector<8x8xf32>, vector<8x8xf32>, vector<8x8xf32> -> vector<8x32xf32>
    %82 = vector.extract_strided_slice %8 {offsets = [8, 0], sizes = [8, 8], strides = [1, 1]} : vector<16x96xbf16> to vector<8x8xbf16>
    %83 = vector.extract_strided_slice %8 {offsets = [8, 32], sizes = [8, 8], strides = [1, 1]} : vector<16x96xbf16> to vector<8x8xbf16>
    %84 = vector.extract_strided_slice %8 {offsets = [8, 64], sizes = [8, 8], strides = [1, 1]} : vector<16x96xbf16> to vector<8x8xbf16>
    %cst_26 = arith.constant dense<0.000000e+00> : vector<8x8xf32>
    %85 = tpu.matmul %82, %83, %cst_26 {dimension_numbers = #tpu.dot_dimension_numbers<[1], [1], [0], [0], [0, 0, 1, 0], [], []>} : vector<8x8xbf16>, vector<8x8xbf16>, vector<8x8xf32> -> vector<8x8xf32>
    %cst_27 = arith.constant 0.353553385 : f32
    %86 = vector.broadcast %cst_27 : f32 to vector<8x8xf32>
    %87 = arith.mulf %85, %86 : vector<8x8xf32>
    %cst_28 = arith.constant dense<0xFF800000> : vector<8xf32>
    %88 = vector.multi_reduction <maximumf>, %87, %cst_28 [1] : vector<8x8xf32> to vector<8xf32>
    %89 = vector.shape_cast %88 : vector<8xf32> to vector<8x1xf32>
    %90 = vector.broadcast %89 : vector<8x1xf32> to vector<8x8xf32>
    %91 = arith.subf %87, %90 : vector<8x8xf32>
    %92 = math.exp %91 : vector<8x8xf32>
    %cst_29 = arith.constant dense<0.000000e+00> : vector<8xf32>
    %93 = vector.multi_reduction <add>, %92, %cst_29 [1] : vector<8x8xf32> to vector<8xf32>
    %94 = vector.shape_cast %93 : vector<8xf32> to vector<8x1xf32>
    %95 = tpu.reciprocal %94 {approx = true} : vector<8x1xf32> -> vector<8x1xf32>
    %96 = vector.broadcast %95 : vector<8x1xf32> to vector<8x8xf32>
    %97 = arith.mulf %92, %96 : vector<8x8xf32>
    %98 = arith.truncf %97 : vector<8x8xf32> to vector<8x8xbf16>
    %cst_30 = arith.constant dense<0.000000e+00> : vector<8x8xf32>
    %99 = tpu.matmul %98, %84, %cst_30 {dimension_numbers = #tpu.dot_dimension_numbers<[1], [0], [0], [1], [0, 0, 1, 1], [], []>} : vector<8x8xbf16>, vector<8x8xbf16>, vector<8x8xf32> -> vector<8x8xf32>
    %100 = vector.extract_strided_slice %8 {offsets = [8, 8], sizes = [8, 8], strides = [1, 1]} : vector<16x96xbf16> to vector<8x8xbf16>
    %101 = vector.extract_strided_slice %8 {offsets = [8, 40], sizes = [8, 8], strides = [1, 1]} : vector<16x96xbf16> to vector<8x8xbf16>
    %102 = vector.extract_strided_slice %8 {offsets = [8, 72], sizes = [8, 8], strides = [1, 1]} : vector<16x96xbf16> to vector<8x8xbf16>
    %cst_31 = arith.constant dense<0.000000e+00> : vector<8x8xf32>
    %103 = tpu.matmul %100, %101, %cst_31 {dimension_numbers = #tpu.dot_dimension_numbers<[1], [1], [0], [0], [0, 0, 1, 0], [], []>} : vector<8x8xbf16>, vector<8x8xbf16>, vector<8x8xf32> -> vector<8x8xf32>
    %cst_32 = arith.constant 0.353553385 : f32
    %104 = vector.broadcast %cst_32 : f32 to vector<8x8xf32>
    %105 = arith.mulf %103, %104 : vector<8x8xf32>
    %cst_33 = arith.constant dense<0xFF800000> : vector<8xf32>
    %106 = vector.multi_reduction <maximumf>, %105, %cst_33 [1] : vector<8x8xf32> to vector<8xf32>
    %107 = vector.shape_cast %106 : vector<8xf32> to vector<8x1xf32>
    %108 = vector.broadcast %107 : vector<8x1xf32> to vector<8x8xf32>
    %109 = arith.subf %105, %108 : vector<8x8xf32>
    %110 = math.exp %109 : vector<8x8xf32>
    %cst_34 = arith.constant dense<0.000000e+00> : vector<8xf32>
    %111 = vector.multi_reduction <add>, %110, %cst_34 [1] : vector<8x8xf32> to vector<8xf32>
    %112 = vector.shape_cast %111 : vector<8xf32> to vector<8x1xf32>
    %113 = tpu.reciprocal %112 {approx = true} : vector<8x1xf32> -> vector<8x1xf32>
    %114 = vector.broadcast %113 : vector<8x1xf32> to vector<8x8xf32>
    %115 = arith.mulf %110, %114 : vector<8x8xf32>
    %116 = arith.truncf %115 : vector<8x8xf32> to vector<8x8xbf16>
    %cst_35 = arith.constant dense<0.000000e+00> : vector<8x8xf32>
    %117 = tpu.matmul %116, %102, %cst_35 {dimension_numbers = #tpu.dot_dimension_numbers<[1], [0], [0], [1], [0, 0, 1, 1], [], []>} : vector<8x8xbf16>, vector<8x8xbf16>, vector<8x8xf32> -> vector<8x8xf32>
    %118 = vector.extract_strided_slice %8 {offsets = [8, 16], sizes = [8, 8], strides = [1, 1]} : vector<16x96xbf16> to vector<8x8xbf16>
    %119 = vector.extract_strided_slice %8 {offsets = [8, 48], sizes = [8, 8], strides = [1, 1]} : vector<16x96xbf16> to vector<8x8xbf16>
    %120 = vector.extract_strided_slice %8 {offsets = [8, 80], sizes = [8, 8], strides = [1, 1]} : vector<16x96xbf16> to vector<8x8xbf16>
    %cst_36 = arith.constant dense<0.000000e+00> : vector<8x8xf32>
    %121 = tpu.matmul %118, %119, %cst_36 {dimension_numbers = #tpu.dot_dimension_numbers<[1], [1], [0], [0], [0, 0, 1, 0], [], []>} : vector<8x8xbf16>, vector<8x8xbf16>, vector<8x8xf32> -> vector<8x8xf32>
    %cst_37 = arith.constant 0.353553385 : f32
    %122 = vector.broadcast %cst_37 : f32 to vector<8x8xf32>
    %123 = arith.mulf %121, %122 : vector<8x8xf32>
    %cst_38 = arith.constant dense<0xFF800000> : vector<8xf32>
    %124 = vector.multi_reduction <maximumf>, %123, %cst_38 [1] : vector<8x8xf32> to vector<8xf32>
    %125 = vector.shape_cast %124 : vector<8xf32> to vector<8x1xf32>
    %126 = vector.broadcast %125 : vector<8x1xf32> to vector<8x8xf32>
    %127 = arith.subf %123, %126 : vector<8x8xf32>
    %128 = math.exp %127 : vector<8x8xf32>
    %cst_39 = arith.constant dense<0.000000e+00> : vector<8xf32>
    %129 = vector.multi_reduction <add>, %128, %cst_39 [1] : vector<8x8xf32> to vector<8xf32>
    %130 = vector.shape_cast %129 : vector<8xf32> to vector<8x1xf32>
    %131 = tpu.reciprocal %130 {approx = true} : vector<8x1xf32> -> vector<8x1xf32>
    %132 = vector.broadcast %131 : vector<8x1xf32> to vector<8x8xf32>
    %133 = arith.mulf %128, %132 : vector<8x8xf32>
    %134 = arith.truncf %133 : vector<8x8xf32> to vector<8x8xbf16>
    %cst_40 = arith.constant dense<0.000000e+00> : vector<8x8xf32>
    %135 = tpu.matmul %134, %120, %cst_40 {dimension_numbers = #tpu.dot_dimension_numbers<[1], [0], [0], [1], [0, 0, 1, 1], [], []>} : vector<8x8xbf16>, vector<8x8xbf16>, vector<8x8xf32> -> vector<8x8xf32>
    %136 = vector.extract_strided_slice %8 {offsets = [8, 24], sizes = [8, 8], strides = [1, 1]} : vector<16x96xbf16> to vector<8x8xbf16>
    %137 = vector.extract_strided_slice %8 {offsets = [8, 56], sizes = [8, 8], strides = [1, 1]} : vector<16x96xbf16> to vector<8x8xbf16>
    %138 = vector.extract_strided_slice %8 {offsets = [8, 88], sizes = [8, 8], strides = [1, 1]} : vector<16x96xbf16> to vector<8x8xbf16>
    %cst_41 = arith.constant dense<0.000000e+00> : vector<8x8xf32>
    %139 = tpu.matmul %136, %137, %cst_41 {dimension_numbers = #tpu.dot_dimension_numbers<[1], [1], [0], [0], [0, 0, 1, 0], [], []>} : vector<8x8xbf16>, vector<8x8xbf16>, vector<8x8xf32> -> vector<8x8xf32>
    %cst_42 = arith.constant 0.353553385 : f32
    %140 = vector.broadcast %cst_42 : f32 to vector<8x8xf32>
    %141 = arith.mulf %139, %140 : vector<8x8xf32>
    %cst_43 = arith.constant dense<0xFF800000> : vector<8xf32>
    %142 = vector.multi_reduction <maximumf>, %141, %cst_43 [1] : vector<8x8xf32> to vector<8xf32>
    %143 = vector.shape_cast %142 : vector<8xf32> to vector<8x1xf32>
    %144 = vector.broadcast %143 : vector<8x1xf32> to vector<8x8xf32>
    %145 = arith.subf %141, %144 : vector<8x8xf32>
    %146 = math.exp %145 : vector<8x8xf32>
    %cst_44 = arith.constant dense<0.000000e+00> : vector<8xf32>
    %147 = vector.multi_reduction <add>, %146, %cst_44 [1] : vector<8x8xf32> to vector<8xf32>
    %148 = vector.shape_cast %147 : vector<8xf32> to vector<8x1xf32>
    %149 = tpu.reciprocal %148 {approx = true} : vector<8x1xf32> -> vector<8x1xf32>
    %150 = vector.broadcast %149 : vector<8x1xf32> to vector<8x8xf32>
    %151 = arith.mulf %146, %150 : vector<8x8xf32>
    %152 = arith.truncf %151 : vector<8x8xf32> to vector<8x8xbf16>
    %cst_45 = arith.constant dense<0.000000e+00> : vector<8x8xf32>
    %153 = tpu.matmul %152, %138, %cst_45 {dimension_numbers = #tpu.dot_dimension_numbers<[1], [0], [0], [1], [0, 0, 1, 1], [], []>} : vector<8x8xbf16>, vector<8x8xbf16>, vector<8x8xf32> -> vector<8x8xf32>
    %154 = tpu.concatenate %99, %117, %135, %153 in 1 : vector<8x8xf32>, vector<8x8xf32>, vector<8x8xf32>, vector<8x8xf32> -> vector<8x32xf32>
    %155 = tpu.concatenate %81, %154 in 0 : vector<8x32xf32>, vector<8x32xf32> -> vector<16x32xf32>
    %156 = arith.truncf %155 : vector<16x32xf32> to vector<16x32xbf16>
    %c0_46 = arith.constant 0 : index
    %c0_47 = arith.constant 0 : index
    %157 = vector.load %arg4[%c0_46, %c0_47] : memref<32x32xbf16, #tpu.memory_space<vmem>>, vector<32x32xbf16>
    %cst_48 = arith.constant dense<0.000000e+00> : vector<16x32xf32>
    %158 = tpu.matmul %156, %157, %cst_48 {dimension_numbers = #tpu.dot_dimension_numbers<[1], [0], [0], [1], [0, 0, 1, 1], [], []>} : vector<16x32xbf16>, vector<32x32xbf16>, vector<16x32xf32> -> vector<16x32xf32>
    %c0_49 = arith.constant 0 : index
    %c0_50 = arith.constant 0 : index
    %159 = vector.load %arg5[%c0_49, %c0_50] : memref<1x32xf32, #tpu.memory_space<vmem>>, vector<1x32xf32>
    %160 = vector.broadcast %159 : vector<1x32xf32> to vector<16x32xf32>
    %161 = arith.addf %158, %160 : vector<16x32xf32>
    %162 = arith.addf %1, %161 : vector<16x32xf32>
    %c0_51 = arith.constant 0 : index
    %c0_52 = arith.constant 0 : index
    %163 = vector.load %arg6[%c0_51, %c0_52] : memref<1x32xf32, #tpu.memory_space<vmem>>, vector<1x32xf32>
    %c0_53 = arith.constant 0 : index
    %c0_54 = arith.constant 0 : index
    %164 = vector.load %arg7[%c0_53, %c0_54] : memref<1x32xf32, #tpu.memory_space<vmem>>, vector<1x32xf32>
    %cst_55 = arith.constant dense<0.000000e+00> : vector<16xf32>
    %165 = vector.multi_reduction <add>, %162, %cst_55 [1] : vector<16x32xf32> to vector<16xf32>
    %166 = vector.shape_cast %165 : vector<16xf32> to vector<16x1xf32>
    %cst_56 = arith.constant 3.200000e+01 : f32
    %167 = vector.broadcast %cst_56 : f32 to vector<16x1xf32>
    %168 = arith.divf %166, %167 : vector<16x1xf32>
    %169 = vector.broadcast %168 : vector<16x1xf32> to vector<16x32xf32>
    %170 = arith.subf %162, %169 : vector<16x32xf32>
    %171 = arith.mulf %170, %170 : vector<16x32xf32>
    %cst_57 = arith.constant dense<0.000000e+00> : vector<16xf32>
    %172 = vector.multi_reduction <add>, %171, %cst_57 [1] : vector<16x32xf32> to vector<16xf32>
    %173 = vector.shape_cast %172 : vector<16xf32> to vector<16x1xf32>
    %cst_58 = arith.constant 3.200000e+01 : f32
    %174 = vector.broadcast %cst_58 : f32 to vector<16x1xf32>
    %175 = arith.divf %173, %174 : vector<16x1xf32>
    %cst_59 = arith.constant 9.99999974E-6 : f32
    %176 = vector.broadcast %cst_59 : f32 to vector<16x1xf32>
    %177 = arith.addf %175, %176 : vector<16x1xf32>
    %178 = math.rsqrt %177 : vector<16x1xf32>
    %179 = vector.broadcast %178 : vector<16x1xf32> to vector<16x32xf32>
    %180 = arith.mulf %170, %179 : vector<16x32xf32>
    %181 = vector.broadcast %163 : vector<1x32xf32> to vector<16x32xf32>
    %182 = arith.mulf %180, %181 : vector<16x32xf32>
    %183 = vector.broadcast %164 : vector<1x32xf32> to vector<16x32xf32>
    %184 = arith.addf %182, %183 : vector<16x32xf32>
    %185 = arith.truncf %184 : vector<16x32xf32> to vector<16x32xbf16>
    %c0_60 = arith.constant 0 : index
    %c0_61 = arith.constant 0 : index
    %186 = vector.load %arg8[%c0_60, %c0_61] : memref<32x128xbf16, #tpu.memory_space<vmem>>, vector<32x128xbf16>
    %cst_62 = arith.constant dense<0.000000e+00> : vector<16x128xf32>
    %187 = tpu.matmul %185, %186, %cst_62 {dimension_numbers = #tpu.dot_dimension_numbers<[1], [0], [0], [1], [0, 0, 1, 1], [], []>} : vector<16x32xbf16>, vector<32x128xbf16>, vector<16x128xf32> -> vector<16x128xf32>
    %c0_63 = arith.constant 0 : index
    %c0_64 = arith.constant 0 : index
    %188 = vector.load %arg9[%c0_63, %c0_64] : memref<1x128xf32, #tpu.memory_space<vmem>>, vector<1x128xf32>
    %189 = vector.broadcast %188 : vector<1x128xf32> to vector<16x128xf32>
    %190 = arith.addf %187, %189 : vector<16x128xf32>
    %cst_65 = arith.constant 0.000000e+00 : f32
    %191 = vector.broadcast %cst_65 : f32 to vector<16x128xf32>
    %192 = arith.maximumf %190, %191 : vector<16x128xf32>
    %193 = arith.truncf %192 : vector<16x128xf32> to vector<16x128xbf16>
    %c0_66 = arith.constant 0 : index
    %c0_67 = arith.constant 0 : index
    %194 = vector.load %arg10[%c0_66, %c0_67] : memref<128x32xbf16, #tpu.memory_space<vmem>>, vector<128x32xbf16>
    %cst_68 = arith.constant dense<0.000000e+00> : vector<16x32xf32>
    %195 = tpu.matmul %193, %194, %cst_68 {dimension_numbers = #tpu.dot_dimension_numbers<[1], [0], [0], [1], [0, 0, 1, 1], [], []>} : vector<16x128xbf16>, vector<128x32xbf16>, vector<16x32xf32> -> vector<16x32xf32>
    %c0_69 = arith.constant 0 : index
    %c0_70 = arith.constant 0 : index
    %196 = vector.load %arg11[%c0_69, %c0_70] : memref<1x32xf32, #tpu.memory_space<vmem>>, vector<1x32xf32>
    %197 = vector.broadcast %196 : vector<1x32xf32> to vector<16x32xf32>
    %198 = arith.addf %195, %197 : vector<16x32xf32>
    %199 = arith.addf %184, %198 : vector<16x32xf32>
    %c0_71 = arith.constant 0 : index
    %c0_72 = arith.constant 0 : index
    %200 = vector.load %arg12[%c0_71, %c0_72] : memref<1x32xf32, #tpu.memory_space<vmem>>, vector<1x32xf32>
    %c0_73 = arith.constant 0 : index
    %c0_74 = arith.constant 0 : index
    %201 = vector.load %arg13[%c0_73, %c0_74] : memref<1x32xf32, #tpu.memory_space<vmem>>, vector<1x32xf32>
    %cst_75 = arith.constant dense<0.000000e+00> : vector<16xf32>
    %202 = vector.multi_reduction <add>, %199, %cst_75 [1] : vector<16x32xf32> to vector<16xf32>
    %203 = vector.shape_cast %202 : vector<16xf32> to vector<16x1xf32>
    %cst_76 = arith.constant 3.200000e+01 : f32
    %204 = vector.broadcast %cst_76 : f32 to vector<16x1xf32>
    %205 = arith.divf %203, %204 : vector<16x1xf32>
    %206 = vector.broadcast %205 : vector<16x1xf32> to vector<16x32xf32>
    %207 = arith.subf %199, %206 : vector<16x32xf32>
    %208 = arith.mulf %207, %207 : vector<16x32xf32>
    %cst_77 = arith.constant dense<0.000000e+00> : vector<16xf32>
    %209 = vector.multi_reduction <add>, %208, %cst_77 [1] : vector<16x32xf32> to vector<16xf32>
    %210 = vector.shape_cast %209 : vector<16xf32> to vector<16x1xf32>
    %cst_78 = arith.constant 3.200000e+01 : f32
    %211 = vector.broadcast %cst_78 : f32 to vector<16x1xf32>
    %212 = arith.divf %210, %211 : vector<16x1xf32>
    %cst_79 = arith.constant 9.99999974E-6 : f32
    %213 = vector.broadcast %cst_79 : f32 to vector<16x1xf32>
    %214 = arith.addf %212, %213 : vector<16x1xf32>
    %215 = math.rsqrt %214 : vector<16x1xf32>
    %216 = vector.broadcast %215 : vector<16x1xf32> to vector<16x32xf32>
    %217 = arith.mulf %207, %216 : vector<16x32xf32>
    %218 = vector.broadcast %200 : vector<1x32xf32> to vector<16x32xf32>
    %219 = arith.mulf %217, %218 : vector<16x32xf32>
    %220 = vector.broadcast %201 : vector<1x32xf32> to vector<16x32xf32>
    %221 = arith.addf %219, %220 : vector<16x32xf32>
    %222 = vector.shape_cast %221 : vector<16x32xf32> to vector<2x8x32xf32>
    %c0_80 = arith.constant 0 : index
    %c0_81 = arith.constant 0 : index
    %c0_82 = arith.constant 0 : index
    %223 = vector.load %arg14[%c0_80, %c0_81, %c0_82] : memref<2x8x32xf32, #tpu.memory_space<vmem>>, vector<2x8x32xf32>
    tpu.vector_store %arg14[%c0_80, %c0_81, %c0_82], %222 {strides = array<i32>} : memref<2x8x32xf32, #tpu.memory_space<vmem>>, vector<2x8x32xf32>,
    return
  }
  func.func @transform_0(%arg0: i32) -> (i32, i32, i32) {
    %c0_i32 = arith.constant 0 : i32
    %c0_i32_0 = arith.constant 0 : i32
    %c0_i32_1 = arith.constant 0 : i32
    return %arg0, %c0_i32, %c0_i32_0 : i32, i32, i32
  }
  func.func @transform_1(%arg0: i32) -> (i32, i32) {
    %c0_i32 = arith.constant 0 : i32
    %c0_i32_0 = arith.constant 0 : i32
    %c0_i32_1 = arith.constant 0 : i32
    return %c0_i32, %c0_i32_0 : i32, i32
  }
  func.func @transform_2(%arg0: i32) -> (i32, i32) {
    %c0_i32 = arith.constant 0 : i32
    %c0_i32_0 = arith.constant 0 : i32
    %c0_i32_1 = arith.constant 0 : i32
    return %c0_i32, %c0_i32_0 : i32, i32
  }
  func.func @transform_3(%arg0: i32) -> (i32, i32) {
    %c0_i32 = arith.constant 0 : i32
    %c0_i32_0 = arith.constant 0 : i32
    %c0_i32_1 = arith.constant 0 : i32
    return %c0_i32, %c0_i32_0 : i32, i32
  }
  func.func @transform_4(%arg0: i32) -> (i32, i32) {
    %c0_i32 = arith.constant 0 : i32
    %c0_i32_0 = arith.constant 0 : i32
    %c0_i32_1 = arith.constant 0 : i32
    return %c0_i32, %c0_i32_0 : i32, i32
  }
  func.func @transform_5(%arg0: i32) -> (i32, i32) {
    %c0_i32 = arith.constant 0 : i32
    %c0_i32_0 = arith.constant 0 : i32
    %c0_i32_1 = arith.constant 0 : i32
    return %c0_i32, %c0_i32_0 : i32, i32
  }
  func.func @transform_6(%arg0: i32) -> (i32, i32) {
    %c0_i32 = arith.constant 0 : i32
    %c0_i32_0 = arith.constant 0 : i32
    %c0_i32_1 = arith.constant 0 : i32
    return %c0_i32, %c0_i32_0 : i32, i32
  }
  func.func @transform_7(%arg0: i32) -> (i32, i32) {
    %c0_i32 = arith.constant 0 : i32
    %c0_i32_0 = arith.constant 0 : i32
    %c0_i32_1 = arith.constant 0 : i32
    return %c0_i32, %c0_i32_0 : i32, i32
  }
  func.func @transform_8(%arg0: i32) -> (i32, i32) {
    %c0_i32 = arith.constant 0 : i32
    %c0_i32_0 = arith.constant 0 : i32
    %c0_i32_1 = arith.constant 0 : i32
    return %c0_i32, %c0_i32_0 : i32, i32
  }
  func.func @transform_9(%arg0: i32) -> (i32, i32) {
    %c0_i32 = arith.constant 0 : i32
    %c0_i32_0 = arith.constant 0 : i32
    %c0_i32_1 = arith.constant 0 : i32
    return %c0_i32, %c0_i32_0 : i32, i32
  }
  func.func @transform_10(%arg0: i32) -> (i32, i32) {
    %c0_i32 = arith.constant 0 : i32
    %c0_i32_0 = arith.constant 0 : i32
    %c0_i32_1 = arith.constant 0 : i32
    return %c0_i32, %c0_i32_0 : i32, i32
  }
  func.func @transform_11(%arg0: i32) -> (i32, i32) {
    %c0_i32 = arith.constant 0 : i32
    %c0_i32_0 = arith.constant 0 : i32
    %c0_i32_1 = arith.constant 0 : i32
    return %c0_i32, %c0_i32_0 : i32, i32
  }
  func.func @transform_12(%arg0: i32) -> (i32, i32) {
    %c0_i32 = arith.constant 0 : i32
    %c0_i32_0 = arith.constant 0 : i32
    %c0_i32_1 = arith.constant 0 : i32
    return %c0_i32, %c0_i32_0 : i32, i32
  }
  func.func @transform_13(%arg0: i32) -> (i32, i32, i32) {
    %c0_i32 = arith.constant 0 : i32
    %c0_i32_0 = arith.constant 0 : i32
    %c0_i32_1 = arith.constant 0 : i32
    return %arg0, %c0_i32, %c0_i32_0 : i32, i32, i32
  }
}

</mosaic_0001>

<llo_original>
// kernel: spiking_transformer_block.1
$region0: #{spiking_transformer_block.1}
  #allocation0 [shape = 'u32[]', space=smem, size = 0x4, offset = 0x4, fixed_abs, tag = 'smem constant byte address 0x4 - core index']
  #allocation1 [shape = 'u32[144,128]{1,0:T(1,128)}', space=vmem, size = 0x12000, scoped, tag = 'internal scratch']
  %s0 = inlined_call_operand.vmem [shape: f32[4,8,32], index: 0, kind: input, shape index: {}]
  %s1 = inlined_call_operand.vmem [shape: bf16[32,96], index: 1, kind: input, shape index: {}]
  %s2 = inlined_call_operand.vmem [shape: f32[1,96], index: 2, kind: input, shape index: {}]
  %s3 = inlined_call_operand.vmem [shape: bf16[32,32], index: 3, kind: input, shape index: {}]
  %s4 = inlined_call_operand.vmem [shape: f32[1,32], index: 4, kind: input, shape index: {}]
  %s5 = inlined_call_operand.vmem [shape: f32[1,32], index: 5, kind: input, shape index: {}]
  %s6 = inlined_call_operand.vmem [shape: f32[1,32], index: 6, kind: input, shape index: {}]
  %s7 = inlined_call_operand.vmem [shape: bf16[32,128], index: 7, kind: input, shape index: {}]
  %s8 = inlined_call_operand.vmem [shape: f32[1,128], index: 8, kind: input, shape index: {}]
  %s9 = inlined_call_operand.vmem [shape: bf16[128,32], index: 9, kind: input, shape index: {}]
  %s10 = inlined_call_operand.vmem [shape: f32[1,32], index: 10, kind: input, shape index: {}]
  %s11 = inlined_call_operand.vmem [shape: f32[1,32], index: 11, kind: input, shape index: {}]
  %s12 = inlined_call_operand.vmem [shape: f32[1,32], index: 12, kind: input, shape index: {}]
  %s13 = inlined_call_operand.hbm [shape: f32[4,8,32], index: 13, kind: output, shape index: {}]
  %s14 = sld [smem:[#allocation0]]
  $region85: #{spiking_transformer_block.1} parent=0
    _
  %s16 = ssub.s32 1, %s14
  %s17 = scalar_select 0, %s16, %s14
  $region1: #{spiking_transformer_block.1} parent=0
    #allocation2 [shape = 'u8[16384]{0}', space=vmem, size = 0x4000, scoped, tag = 'output window, operand 0']
    #allocation3 [shape = 's32[2]{0}', space=sflag, size = 0x8, scoped, tag = 'scoped memory for spiking_transformer_block.1']
    %18 = vsyncpa [#allocation3], 0
    %s19 = scalar_lea.sflag [#allocation3], 1
    %20 = vsyncpa %s19, 0
    loop: start=0, step=1, limit=4
    $region2: #{spiking_transformer_block.1} parent=1 // loop_pre_header
      _
    $region3: #{spiking_transformer_block.1} parent=1 // loop_header
      %s22 = sphi 0, %s26
      %p23 = scmp.ge.s32.totalorder %s22, 4
      %s32 = sphi 0, %s34
      %s35 = sphi 0, %s32
      %s36 = sphi 0, %s35
      %s52 = sphi 0, %s36
      %s56 = sphi 0, %s56
      %s58 = sphi 0, %s56
      %s59 = sphi 0, %s58
      %s73 = sphi 0, %s59
      %s77 = sphi 0, %s77
      %s79 = sphi 0, %s77
      %s80 = sphi 0, %s79
      %s94 = sphi 0, %s80
      %s98 = sphi 0, %s98
      %s100 = sphi 0, %s98
      %s101 = sphi 0, %s100
      %s115 = sphi 0, %s101
      %s119 = sphi 0, %s119
      %s121 = sphi 0, %s119
      %s122 = sphi 0, %s121
      %s136 = sphi 0, %s122
      %s140 = sphi 0, %s140
      %s142 = sphi 0, %s140
      %s143 = sphi 0, %s142
      %s157 = sphi 0, %s143
      %s161 = sphi 0, %s161
      %s163 = sphi 0, %s161
      %s164 = sphi 0, %s163
      %s178 = sphi 0, %s164
      %s182 = sphi 0, %s182
      %s184 = sphi 0, %s182
      %s185 = sphi 0, %s184
      %s199 = sphi 0, %s185
      %s203 = sphi 0, %s203
      %s205 = sphi 0, %s203
      %s206 = sphi 0, %s205
      %s220 = sphi 0, %s206
      %s224 = sphi 0, %s224
      %s226 = sphi 0, %s224
      %s227 = sphi 0, %s226
      %s241 = sphi 0, %s227
      %s245 = sphi 0, %s245
      %s247 = sphi 0, %s245
      %s248 = sphi 0, %s247
      %s262 = sphi 0, %s248
      %s266 = sphi 0, %s266
      %s268 = sphi 0, %s266
      %s269 = sphi 0, %s268
      %s283 = sphi 0, %s269
      %s287 = sphi 0, %s287
      %s289 = sphi 0, %s287
      %s290 = sphi 0, %s289
      %s304 = sphi 0, %s290
      %s310 = sphi 0, %s312
      %s313 = sphi 0, %s310
      %s314 = sphi 0, %s313
      %s330 = sphi 0, %s314
    $region4: #{spiking_transformer_block.1} parent=1 // loop_header_branch
      %25 = sbr.rel (%p23) target = $region8
    $region5: #{spiking_transformer_block.1} parent=1 // loop_body
      %s27 = ssub.s32 %s22, 1
      %s28 = ssub.s32 %s22, 2
      %s29 = sadd.s32 %s22, 1
      %s30 = ssub.s32 %s22, %s29
      %p31 = scmp.eq.s32.totalorder %s30, 0
      %s33 = sadd.s32 %s32, 1
      %s34 = scalar_select %p31, %s32, %s33
      %p37 = pneg %p31
      %p38 = scmp.eq.s32.totalorder %s22, 1
      %p39 = por %p37, %p38
      %p40 = scmp.ne.s32.totalorder %s32, %s35
      %p41 = scmp.eq.s32.totalorder %s22, 0
      %p42 = por %p40, %p41
      %p43 = scmp.ne.s32.totalorder %s32, %s35
      %p44 = scmp.eq.s32.totalorder %s27, 1
      %p45 = por %p43, %p44
      %p46 = scmp.ne.s32.totalorder %s35, %s36
      %p47 = scmp.eq.s32.totalorder %s27, 0
      %p48 = por %p46, %p47
      %p49 = scmp.ne.s32.totalorder %s35, %s36
      %p50 = scmp.eq.s32.totalorder %s28, 1
      %p51 = por %p49, %p50
      %p53 = scmp.ne.s32.totalorder %s36, %s52
      %p54 = scmp.eq.s32.totalorder %s28, 0
      %p55 = por %p53, %p54
      %s57 = sadd.s32 %s56, 1
      %p60 = scmp.eq.s32.totalorder %s22, 1
      %p61 = scmp.ne.s32.totalorder %s56, %s58
      %p62 = scmp.eq.s32.totalorder %s22, 0
      %p63 = por %p61, %p62
      %p64 = scmp.ne.s32.totalorder %s56, %s58
      %p65 = scmp.eq.s32.totalorder %s27, 1
      %p66 = por %p64, %p65
      %p67 = scmp.ne.s32.totalorder %s58, %s59
      %p68 = scmp.eq.s32.totalorder %s27, 0
      %p69 = por %p67, %p68
      %p70 = scmp.ne.s32.totalorder %s58, %s59
      %p71 = scmp.eq.s32.totalorder %s28, 1
      %p72 = por %p70, %p71
      %p74 = scmp.ne.s32.totalorder %s59, %s73
      %p75 = scmp.eq.s32.totalorder %s28, 0
      %p76 = por %p74, %p75
      %s78 = sadd.s32 %s77, 1
      %p81 = scmp.eq.s32.totalorder %s22, 1
      %p82 = scmp.ne.s32.totalorder %s77, %s79
      %p83 = scmp.eq.s32.totalorder %s22, 0
      %p84 = por %p82, %p83
      %p85 = scmp.ne.s32.totalorder %s77, %s79
      %p86 = scmp.eq.s32.totalorder %s27, 1
      %p87 = por %p85, %p86
      %p88 = scmp.ne.s32.totalorder %s79, %s80
      %p89 = scmp.eq.s32.totalorder %s27, 0
      %p90 = por %p88, %p89
      %p91 = scmp.ne.s32.totalorder %s79, %s80
      %p92 = scmp.eq.s32.totalorder %s28, 1
      %p93 = por %p91, %p92
      %p95 = scmp.ne.s32.totalorder %s80, %s94
      %p96 = scmp.eq.s32.totalorder %s28, 0
      %p97 = por %p95, %p96
      %s99 = sadd.s32 %s98, 1
      %p102 = scmp.eq.s32.totalorder %s22, 1
      %p103 = scmp.ne.s32.totalorder %s98, %s100
      %p104 = scmp.eq.s32.totalorder %s22, 0
      %p105 = por %p103, %p104
      %p106 = scmp.ne.s32.totalorder %s98, %s100
      %p107 = scmp.eq.s32.totalorder %s27, 1
      %p108 = por %p106, %p107
      %p109 = scmp.ne.s32.totalorder %s100, %s101
      %p110 = scmp.eq.s32.totalorder %s27, 0
      %p111 = por %p109, %p110
      %p112 = scmp.ne.s32.totalorder %s100, %s101
      %p113 = scmp.eq.s32.totalorder %s28, 1
      %p114 = por %p112, %p113
      %p116 = scmp.ne.s32.totalorder %s101, %s115
      %p117 = scmp.eq.s32.totalorder %s28, 0
      %p118 = por %p116, %p117
      %s120 = sadd.s32 %s119, 1
      %p123 = scmp.eq.s32.totalorder %s22, 1
      %p124 = scmp.ne.s32.totalorder %s119, %s121
      %p125 = scmp.eq.s32.totalorder %s22, 0
      %p126 = por %p124, %p125
      %p127 = scmp.ne.s32.totalorder %s119, %s121
      %p128 = scmp.eq.s32.totalorder %s27, 1
      %p129 = por %p127, %p128
      %p130 = scmp.ne.s32.totalorder %s121, %s122
      %p131 = scmp.eq.s32.totalorder %s27, 0
      %p132 = por %p130, %p131
      %p133 = scmp.ne.s32.totalorder %s121, %s122
      %p134 = scmp.eq.s32.totalorder %s28, 1
      %p135 = por %p133, %p134
      %p137 = scmp.ne.s32.totalorder %s122, %s136
      %p138 = scmp.eq.s32.totalorder %s28, 0
      %p139 = por %p137, %p138
      %s141 = sadd.s32 %s140, 1
      %p144 = scmp.eq.s32.totalorder %s22, 1
      %p145 = scmp.ne.s32.totalorder %s140, %s142
      %p146 = scmp.eq.s32.totalorder %s22, 0
      %p147 = por %p145, %p146
      %p148 = scmp.ne.s32.totalorder %s140, %s142
      %p149 = scmp.eq.s32.totalorder %s27, 1
      %p150 = por %p148, %p149
      %p151 = scmp.ne.s32.totalorder %s142, %s143
      %p152 = scmp.eq.s32.totalorder %s27, 0
      %p153 = por %p151, %p152
      %p154 = scmp.ne.s32.totalorder %s142, %s143
      %p155 = scmp.eq.s32.totalorder %s28, 1
      %p156 = por %p154, %p155
      %p158 = scmp.ne.s32.totalorder %s143, %s157
      %p159 = scmp.eq.s32.totalorder %s28, 0
      %p160 = por %p158, %p159
      %s162 = sadd.s32 %s161, 1
      %p165 = scmp.eq.s32.totalorder %s22, 1
      %p166 = scmp.ne.s32.totalorder %s161, %s163
      %p167 = scmp.eq.s32.totalorder %s22, 0
      %p168 = por %p166, %p167
      %p169 = scmp.ne.s32.totalorder %s161, %s163
      %p170 = scmp.eq.s32.totalorder %s27, 1
      %p171 = por %p169, %p170
      %p172 = scmp.ne.s32.totalorder %s163, %s164
      %p173 = scmp.eq.s32.totalorder %s27, 0
      %p174 = por %p172, %p173
      %p175 = scmp.ne.s32.totalorder %s163, %s164
      %p176 = scmp.eq.s32.totalorder %s28, 1
      %p177 = por %p175, %p176
      %p179 = scmp.ne.s32.totalorder %s164, %s178
      %p180 = scmp.eq.s32.totalorder %s28, 0
      %p181 = por %p179, %p180
      %s183 = sadd.s32 %s182, 1
      %p186 = scmp.eq.s32.totalorder %s22, 1
      %p187 = scmp.ne.s32.totalorder %s182, %s184
      %p188 = scmp.eq.s32.totalorder %s22, 0
      %p189 = por %p187, %p188
      %p190 = scmp.ne.s32.totalorder %s182, %s184
      %p191 = scmp.eq.s32.totalorder %s27, 1
      %p192 = por %p190, %p191
      %p193 = scmp.ne.s32.totalorder %s184, %s185
      %p194 = scmp.eq.s32.totalorder %s27, 0
      %p195 = por %p193, %p194
      %p196 = scmp.ne.s32.totalorder %s184, %s185
      %p197 = scmp.eq.s32.totalorder %s28, 1
      %p198 = por %p196, %p197
      %p200 = scmp.ne.s32.totalorder %s185, %s199
      %p201 = scmp.eq.s32.totalorder %s28, 0
      %p202 = por %p200, %p201
      %s204 = sadd.s32 %s203, 1
      %p207 = scmp.eq.s32.totalorder %s22, 1
      %p208 = scmp.ne.s32.totalorder %s203, %s205
      %p209 = scmp.eq.s32.totalorder %s22, 0
      %p210 = por %p208, %p209
      %p211 = scmp.ne.s32.totalorder %s203, %s205
      %p212 = scmp.eq.s32.totalorder %s27, 1
      %p213 = por %p211, %p212
      %p214 = scmp.ne.s32.totalorder %s205, %s206
      %p215 = scmp.eq.s32.totalorder %s27, 0
      %p216 = por %p214, %p215
      %p217 = scmp.ne.s32.totalorder %s205, %s206
      %p218 = scmp.eq.s32.totalorder %s28, 1
      %p219 = por %p217, %p218
      %p221 = scmp.ne.s32.totalorder %s206, %s220
      %p222 = scmp.eq.s32.totalorder %s28, 0
      %p223 = por %p221, %p222
      %s225 = sadd.s32 %s224, 1
      %p228 = scmp.eq.s32.totalorder %s22, 1
      %p229 = scmp.ne.s32.totalorder %s224, %s226
      %p230 = scmp.eq.s32.totalorder %s22, 0
      %p231 = por %p229, %p230
      %p232 = scmp.ne.s32.totalorder %s224, %s226
      %p233 = scmp.eq.s32.totalorder %s27, 1
      %p234 = por %p232, %p233
      %p235 = scmp.ne.s32.totalorder %s226, %s227
      %p236 = scmp.eq.s32.totalorder %s27, 0
      %p237 = por %p235, %p236
      %p238 = scmp.ne.s32.totalorder %s226, %s227
      %p239 = scmp.eq.s32.totalorder %s28, 1
      %p240 = por %p238, %p239
      %p242 = scmp.ne.s32.totalorder %s227, %s241
      %p243 = scmp.eq.s32.totalorder %s28, 0
      %p244 = por %p242, %p243
      %s246 = sadd.s32 %s245, 1
      %p249 = scmp.eq.s32.totalorder %s22, 1
      %p250 = scmp.ne.s32.totalorder %s245, %s247
      %p251 = scmp.eq.s32.totalorder %s22, 0
      %p252 = por %p250, %p251
      %p253 = scmp.ne.s32.totalorder %s245, %s247
      %p254 = scmp.eq.s32.totalorder %s27, 1
      %p255 = por %p253, %p254
      %p256 = scmp.ne.s32.totalorder %s247, %s248
      %p257 = scmp.eq.s32.totalorder %s27, 0
      %p258 = por %p256, %p257
      %p259 = scmp.ne.s32.totalorder %s247, %s248
      %p260 = scmp.eq.s32.totalorder %s28, 1
      %p261 = por %p259, %p260
      %p263 = scmp.ne.s32.totalorder %s248, %s262
      %p264 = scmp.eq.s32.totalorder %s28, 0
      %p265 = por %p263, %p264
      %s267 = sadd.s32 %s266, 1
      %p270 = scmp.eq.s32.totalorder %s22, 1
      %p271 = scmp.ne.s32.totalorder %s266, %s268
      %p272 = scmp.eq.s32.totalorder %s22, 0
      %p273 = por %p271, %p272
      %p274 = scmp.ne.s32.totalorder %s266, %s268
      %p275 = scmp.eq.s32.totalorder %s27, 1
      %p276 = por %p274, %p275
      %p277 = scmp.ne.s32.totalorder %s268, %s269
      %p278 = scmp.eq.s32.totalorder %s27, 0
      %p279 = por %p277, %p278
      %p280 = scmp.ne.s32.totalorder %s268, %s269
      %p281 = scmp.eq.s32.totalorder %s28, 1
      %p282 = por %p280, %p281
      %p284 = scmp.ne.s32.totalorder %s269, %s283
      %p285 = scmp.eq.s32.totalorder %s28, 0
      %p286 = por %p284, %p285
      %s288 = sadd.s32 %s287, 1
      %p291 = scmp.eq.s32.totalorder %s22, 1
      %p292 = scmp.ne.s32.totalorder %s287, %s289
      %p293 = scmp.eq.s32.totalorder %s22, 0
      %p294 = por %p292, %p293
      %p295 = scmp.ne.s32.totalorder %s287, %s289
      %p296 = scmp.eq.s32.totalorder %s27, 1
      %p297 = por %p295, %p296
      %p298 = scmp.ne.s32.totalorder %s289, %s290
      %p299 = scmp.eq.s32.totalorder %s27, 0
      %p300 = por %p298, %p299
      %p301 = scmp.ne.s32.totalorder %s289, %s290
      %p302 = scmp.eq.s32.totalorder %s28, 1
      %p303 = por %p301, %p302
      %p305 = scmp.ne.s32.totalorder %s290, %s304
      %p306 = scmp.eq.s32.totalorder %s28, 0
      %p307 = por %p305, %p306
      %s308 = ssub.s32 %s22, %s29
      %p309 = scmp.eq.s32.totalorder %s308, 0
      %s311 = sadd.s32 %s310, 1
      %s312 = scalar_select %p309, %s310, %s311
      %p315 = pneg %p309
      %p316 = scmp.eq.s32.totalorder %s22, 1
      %p317 = por %p315, %p316
      %p318 = scmp.ne.s32.totalorder %s310, %s313
      %p319 = scmp.eq.s32.totalorder %s22, 0
      %p320 = por %p318, %p319
      %p321 = scmp.ne.s32.totalorder %s310, %s313
      %p322 = scmp.eq.s32.totalorder %s27, 1
      %p323 = por %p321, %p322
      %p324 = scmp.ne.s32.totalorder %s313, %s314
      %p325 = scmp.eq.s32.totalorder %s27, 0
      %p326 = por %p324, %p325
      %p327 = scmp.ne.s32.totalorder %s313, %s314
      %p328 = scmp.eq.s32.totalorder %s28, 1
      %p329 = por %p327, %p328
      %p331 = scmp.ne.s32.totalorder %s314, %s330
      %p332 = scmp.eq.s32.totalorder %s28, 0
      %p333 = por %p331, %p332
      %p334 = scmp.le.s32.totalorder 1, %s22
      %p335 = scmp.lt.s32.totalorder %s22, 3
      %p336 = pnand %p334, %p335
      %p337 = pneg %p336
      // Predicated region
      $region9: #{spiking_transformer_block.1} parent=5 // pred_check
        _
      $region10: #{spiking_transformer_block.1} parent=5 // pred_check_branch
        %339 = sbr.rel (%p336) target = $region12
      $region11: #{spiking_transformer_block.1} parent=5 // pred_region
        %s340 = ssub.s32 %s22, 1
        // Predicated region
        $region13: #{spiking_transformer_block.1} parent=11 // pred_check
          %p341 = pneg %p69
        $region14: #{spiking_transformer_block.1} parent=11 // pred_check_branch
          %343 = sbr.rel (%p341) target = $region16
        $region15: #{spiking_transformer_block.1} parent=11 // pred_region
          _
        $region16: #{spiking_transformer_block.1} parent=11 // pred_fallthru
          _
        // Predicated region
        $region17: #{spiking_transformer_block.1} parent=11 // pred_check
          %p344 = pneg %p90
        $region18: #{spiking_transformer_block.1} parent=11 // pred_check_branch
          %346 = sbr.rel (%p344) target = $region20
        $region19: #{spiking_transformer_block.1} parent=11 // pred_region
          _
        $region20: #{spiking_transformer_block.1} parent=11 // pred_fallthru
          _
        // Predicated region
        $region21: #{spiking_transformer_block.1} parent=11 // pred_check
          %p347 = pneg %p111
        $region22: #{spiking_transformer_block.1} parent=11 // pred_check_branch
          %349 = sbr.rel (%p347) target = $region24
        $region23: #{spiking_transformer_block.1} parent=11 // pred_region
          _
        $region24: #{spiking_transformer_block.1} parent=11 // pred_fallthru
          _
        // Predicated region
        $region25: #{spiking_transformer_block.1} parent=11 // pred_check
          %p350 = pneg %p132
        $region26: #{spiking_transformer_block.1} parent=11 // pred_check_branch
          %352 = sbr.rel (%p350) target = $region28
        $region27: #{spiking_transformer_block.1} parent=11 // pred_region
          _
        $region28: #{spiking_transformer_block.1} parent=11 // pred_fallthru
          _
        // Predicated region
        $region29: #{spiking_transformer_block.1} parent=11 // pred_check
          %p353 = pneg %p153
        $region30: #{spiking_transformer_block.1} parent=11 // pred_check_branch
          %355 = sbr.rel (%p353) target = $region32
        $region31: #{spiking_transformer_block.1} parent=11 // pred_region
          _
        $region32: #{spiking_transformer_block.1} parent=11 // pred_fallthru
          _
        // Predicated region
        $region33: #{spiking_transformer_block.1} parent=11 // pred_check
          %p356 = pneg %p174
        $region34: #{spiking_transformer_block.1} parent=11 // pred_check_branch
          %358 = sbr.rel (%p356) target = $region36
        $region35: #{spiking_transformer_block.1} parent=11 // pred_region
          _
        $region36: #{spiking_transformer_block.1} parent=11 // pred_fallthru
          _
        // Predicated region
        $region37: #{spiking_transformer_block.1} parent=11 // pred_check
          %p359 = pneg %p195
        $region38: #{spiking_transformer_block.1} parent=11 // pred_check_branch
          %361 = sbr.rel (%p359) target = $region40
        $region39: #{spiking_transformer_block.1} parent=11 // pred_region
          _
        $region40: #{spiking_transformer_block.1} parent=11 // pred_fallthru
          _
        // Predicated region
        $region41: #{spiking_transformer_block.1} parent=11 // pred_check
          %p362 = pneg %p216
        $region42: #{spiking_transformer_block.1} parent=11 // pred_check_branch
          %364 = sbr.rel (%p362) target = $region44
        $region43: #{spiking_transformer_block.1} parent=11 // pred_region
          _
        $region44: #{spiking_transformer_block.1} parent=11 // pred_fallthru
          _
        // Predicated region
        $region45: #{spiking_transformer_block.1} parent=11 // pred_check
          %p365 = pneg %p237
        $region46: #{spiking_transformer_block.1} parent=11 // pred_check_branch
          %367 = sbr.rel (%p365) target = $region48
        $region47: #{spiking_transformer_block.1} parent=11 // pred_region
          _
        $region48: #{spiking_transformer_block.1} parent=11 // pred_fallthru
          _
        // Predicated region
        $region49: #{spiking_transformer_block.1} parent=11 // pred_check
          %p368 = pneg %p258
        $region50: #{spiking_transformer_block.1} parent=11 // pred_check_branch
          %370 = sbr.rel (%p368) target = $region52
        $region51: #{spiking_transformer_block.1} parent=11 // pred_region
          _
        $region52: #{spiking_transformer_block.1} parent=11 // pred_fallthru
          _
        // Predicated region
        $region53: #{spiking_transformer_block.1} parent=11 // pred_check
          %p371 = pneg %p279
        $region54: #{spiking_transformer_block.1} parent=11 // pred_check_branch
          %373 = sbr.rel (%p371) target = $region56
        $region55: #{spiking_transformer_block.1} parent=11 // pred_region
          _
        $region56: #{spiking_transformer_block.1} parent=11 // pred_fallthru
          _
        // Predicated region
        $region57: #{spiking_transformer_block.1} parent=11 // pred_check
          %p374 = pneg %p300
        $region58: #{spiking_transformer_block.1} parent=11 // pred_check_branch
          %376 = sbr.rel (%p374) target = $region60
        $region59: #{spiking_transformer_block.1} parent=11 // pred_region
          _
        $region60: #{spiking_transformer_block.1} parent=11 // pred_fallthru
          _
      $region12: #{spiking_transformer_block.1} parent=5 // pred_fallthru
        _
      %p377 = scmp.lt.s32.totalorder %s22, 2
      // Predicated region
      $region61: #{spiking_transformer_block.1} parent=5 // pred_check
        %p378 = pneg %p377
      $region62: #{spiking_transformer_block.1} parent=5 // pred_check_branch
        %380 = sbr.rel (%p378) target = $region64
      $region63: #{spiking_transformer_block.1} parent=5 // pred_region
        // Predicated region
        $region65: #{spiking_transformer_block.1} parent=63 // pred_check
          %p381 = pneg %p42
        $region66: #{spiking_transformer_block.1} parent=63 // pred_check_branch
          %383 = sbr.rel (%p381) target = $region68
        $region67: #{spiking_transformer_block.1} parent=63 // pred_region
          %s384 = smul.u32 2, %s22
          %p385 = scmp.lt.s32.totalorder %s384, 3
          %s386 = scalar_select %p385, %s384, 3
          %s387 = smul.addr %s386, 8
          %s388 = scalar_lea.vmem %s0, %s387
          %s389 = smul.u32 2, %s22
        $region68: #{spiking_transformer_block.1} parent=63 // pred_fallthru
          _
      $region64: #{spiking_transformer_block.1} parent=5 // pred_fallthru
        _
      %p390 = scmp.le.s32.totalorder 1, %s22
      %p391 = scmp.lt.s32.totalorder %s22, 3
      %p392 = pnand %p390, %p391
      %p393 = pneg %p392
      // Predicated region
      $region69: #{spiking_transformer_block.1} parent=5 // pred_check
        _
      $region70: #{spiking_transformer_block.1} parent=5 // pred_check_branch
        %395 = sbr.rel (%p392) target = $region72
      $region71: #{spiking_transformer_block.1} parent=5 // pred_region
        %s396 = ssub.s32 %s22, 1
        %s397 = smul.u32 2, %s27
        %p398 = scmp.lt.s32.totalorder %s397, 3
        %s399 = scalar_select %p398, %s397, 3
        %s400 = smul.addr %s399, 8
        %s401 = scalar_lea.vmem %s0, %s400
        %p402 = pneg %p48
        %p403 = pneg %p45
        %p404 = pneg %p69
        %p405 = pneg %p66
        %p406 = pneg %p90
        %p407 = pneg %p87
        %p408 = pneg %p111
        %p409 = pneg %p108
        %p410 = pneg %p132
        %p411 = pneg %p129
        %p412 = pneg %p153
        %p413 = pneg %p150
        %p414 = pneg %p174
        %p415 = pneg %p171
        %p416 = pneg %p195
        %p417 = pneg %p192
        %p418 = pneg %p216
        %p419 = pneg %p213
        %p420 = pneg %p237
        %p421 = pneg %p234
        %p422 = pneg %p258
        %p423 = pneg %p255
        %p424 = pneg %p279
        %p425 = pneg %p276
        %p426 = pneg %p300
        %p427 = pneg %p297
        %p428 = pneg %p326
        %p429 = pneg %p323
        %s430 = sand.u32 %s313, 1
        %s431 = scalar_lea.sflag [#allocation3], %s430
        %s432 = sand.u32 %s313, 1
        %s433 = smul.addr %s432, 16
        %s434 = scalar_lea.vmem [#allocation2], %s433
        %s435 = smul.u32 2, %s27
        %p436 = scmp.lt.s32.totalorder %s435, 3
        %s437 = scalar_select %p436, %s435, 3
        %s438 = smul.addr %s437, 8
        %s439 = scalar_lea.vmem %s0, %s438
        %s440 = smul.u32 2, %s27
        %s441 = smul.u32 2, %s27
        %v443 = vld [vmem:[%s439] sm:$0xff]
        %v444 = vld [vmem:[%s439 + $0x8] sm:$0xff]
        %v445 = vpack.c.bf16 %v444, %v443
        %v446 = vld [vmem:[%s1] sm:$0xf]
        %v447 = vld [vmem:[%s1 + $0x4] sm:$0xf]
        %v448 = vld [vmem:[%s1 + $0x8] sm:$0xf]
        %v449 = vld [vmem:[%s1 + $0xc] sm:$0xf]
        %v450 = vld [vmem:[%s2] sm:$0x1]
        %v452 = vlaneseq
        %v453 = vshrl.u32 %v452, 7
        %v454 = vsub.s32 0, %v453
        %v455 = vrot.slane %v450, %v454
        %v461 = vunpack.c.l.b16 %v446
        %v462 = vunpack.c.l.b16 %v447
        %v463 = vunpack.c.l.b16 %v448
        %v464 = vunpack.c.l.b16 %v449
        %v465 = vpack.c.b16 %v462, %v461
        %v466 = vpack.c.b16 %v464, %v463
        %vm469 = vcmask 261120
        %v471 = vsel %vm469, %v445, 0
        %473 = vmatprep.subr.bf16.mxu0 0
        %474 = vmatpush1.bf16.msra.mxu0 0
        %475 = vmatprep.subr.bf16.mxu0 0
        %476 = vmatpush1.bf16.msra.mxu0 0
        %477 = vmatprep.subr.bf16.mxu0 0
        %478 = vmatpush1.bf16.msra.mxu0 0
        %479 = vmatprep.subr.bf16.mxu0 0
        %480 = vmatpush1.bf16.msra.mxu0 0
        %481 = vmatprep.subr.bf16.mxu0 0
        %482 = vmatpush1.bf16.msra.mxu0 0
        %483 = vmatprep.subr.bf16.mxu0 0
        %484 = vmatpush1.bf16.msra.mxu0 0
        %485 = vmatprep.subr.bf16.mxu0 0
        %486 = vmatpush1.bf16.msra.mxu0 %v466
        %487 = vmatprep.subr.bf16.mxu0 0
        %488 = vmatpush1.bf16.msra.mxu0 %v465
        %489 = vmatprep.subr.bf16.mxu0 0
        %490 = vmatpush2.bf16.msra.mxu0 0
        %491 = vmatprep.subr.bf16.mxu0 0
        %492 = vmatpush2.bf16.msra.mxu0 0
        %493 = vmatprep.subr.bf16.mxu0 0
        %494 = vmatpush2.bf16.msra.mxu0 0
        %495 = vmatprep.subr.bf16.mxu0 0
        %496 = vmatpush2.bf16.msra.mxu0 0
        %497 = vmatprep.subr.bf16.mxu0 0
        %498 = vmatpush2.bf16.msra.mxu0 0
        %499 = vmatprep.subr.bf16.mxu0 0
        %500 = vmatpush2.bf16.msra.mxu0 0
        %501 = vmatprep.subr.bf16.mxu0 0
        %502 = vmatpush2.bf16.msra.mxu0 0
        %503 = vmatprep.subr.bf16.mxu0 0
        %504 = vmatpush2.bf16.msra.mxu0 0
        %505 = vmatprep.mubr.bf16.mxu0 0
        %506 = vmatmul.mubr.bf16.gmra.mxu0 %v471
        %v507 = vpop.f32.mrf.mxu0
        %v508 = vadd.f32 %v455, %v507
        %v509 = vpop.f32.mrf.mxu0
        %v510 = vpop.f32.mrf.mxu0
        %v511 = vadd.f32 %v455, %v510
        %v512 = vpop.f32.mrf.mxu0
        %513 = vdwg.mxu0
        %v514 = vpack.c.bf16 %v511, %v508
        %516 = vrot.lane.b32.xlu0 %v514, 96
        %v517 = vpop.permute.xlu0 %516
        %vm518 = vcmask 64512
        %v520 = vsel %vm518, %v514, 0
        %v523 = vsel %vm518, %v517, 0
        %525 = vmatprep.subr.bf16.mxu0 0
        %526 = vmatpush1.bf16.xpose.msra.mxu0 0
        %527 = vmatprep.subr.bf16.mxu0 0
        %528 = vmatpush1.bf16.xpose.msra.mxu0 0
        %529 = vmatprep.subr.bf16.mxu0 0
        %530 = vmatpush1.bf16.xpose.msra.mxu0 0
        %531 = vmatprep.subr.bf16.mxu0 0
        %532 = vmatpush1.bf16.xpose.msra.mxu0 0
        %533 = vmatprep.subr.bf16.mxu0 0
        %534 = vmatpush1.bf16.xpose.msra.mxu0 0
        %535 = vmatprep.subr.bf16.mxu0 0
        %536 = vmatpush1.bf16.xpose.msra.mxu0 0
        %537 = vmatprep.subr.bf16.mxu0 0
        %538 = vmatpush1.bf16.xpose.msra.mxu0 0
        %539 = vmatprep.subr.bf16.mxu0 0
        %540 = vmatpush1.bf16.xpose.msra.mxu0 %v523
        %541 = vmatprep.subr.bf16.mxu0 0
        %542 = vmatpush2.bf16.xpose.msra.mxu0 0
        %543 = vmatprep.subr.bf16.mxu0 0
        %544 = vmatpush2.bf16.xpose.msra.mxu0 0
        %545 = vmatprep.subr.bf16.mxu0 0
        %546 = vmatpush2.bf16.xpose.msra.mxu0 0
        %547 = vmatprep.subr.bf16.mxu0 0
        %548 = vmatpush2.bf16.xpose.msra.mxu0 0
        %549 = vmatprep.subr.bf16.mxu0 0
        %550 = vmatpush2.bf16.xpose.msra.mxu0 0
        %551 = vmatprep.subr.bf16.mxu0 0
        %552 = vmatpush2.bf16.xpose.msra.mxu0 0
        %553 = vmatprep.subr.bf16.mxu0 0
        %554 = vmatpush2.bf16.xpose.msra.mxu0 0
        %555 = vmatprep.subr.bf16.mxu0 0
        %556 = vmatpush2.bf16.xpose.msra.mxu0 0
        %557 = vmatprep.mubr.bf16.mxu0 0
        %558 = vmatmul.mubr.bf16.gmra.mxu0 %v520
        %v559 = vpop.f32.mrf.mxu0
        %v560 = vadd.f32 0.0, %v559
        %v561 = vpop.f32.mrf.mxu0
        %v562 = vpop.f32.mrf.mxu0
        %v563 = vpop.f32.mrf.mxu0
        %564 = vdwg.mxu0
        %v565 = vmul.f32 %v560, 0.35355338
        %v566 = vsel %vm518, %v565, -inf
        %567 = vmax.xlane.f32.xlu0 %v566
        %v568 = vpop.xlane.xlu0 %567
        %v569 = vsub.f32 %v565, %v568
        %v570 = vmul.f32 %v569, 1.442695
        %v571 = vpow.pop %v570
        %v572 = vsel %vm518, %v571, 0.0
        %573 = vadd.xlane.f32.xlu0 %v572
        %v574 = vpop.xlane.xlu0 %573
        %v575 = vrcp.pop %v574
        %v576 = vmul.f32 %v571, %v575
        %v577 = vpack.c.bf16 %v576, %v576
        %578 = vrot.lane.b32.xlu0 %v514, 64
        %v579 = vpop.permute.xlu0 %578
        %v581 = vsel %vm518, %v577, 0
        %vm583 = vcmask 1043456
        %v585 = vsel %vm583, %v579, 0
        %587 = vmatprep.subr.bf16.mxu0 0
        %588 = vmatpush1.bf16.msra.mxu0 0
        %589 = vmatprep.subr.bf16.mxu0 0
        %590 = vmatpush1.bf16.msra.mxu0 0
        %591 = vmatprep.subr.bf16.mxu0 0
        %592 = vmatpush1.bf16.msra.mxu0 0
        %593 = vmatprep.subr.bf16.mxu0 0
        %594 = vmatpush1.bf16.msra.mxu0 0
        %595 = vmatprep.subr.bf16.mxu0 0
        %596 = vmatpush1.bf16.msra.mxu0 0
        %597 = vmatprep.subr.bf16.mxu0 0
        %598 = vmatpush1.bf16.msra.mxu0 0
        %599 = vmatprep.subr.bf16.mxu0 0
        %600 = vmatpush1.bf16.msra.mxu0 0
        %601 = vmatprep.subr.bf16.mxu0 0
        %602 = vmatpush1.bf16.msra.mxu0 %v585
        %603 = vmatprep.subr.bf16.mxu0 0
        %604 = vmatpush2.bf16.msra.mxu0 0
        %605 = vmatprep.subr.bf16.mxu0 0
        %606 = vmatpush2.bf16.msra.mxu0 0
        %607 = vmatprep.subr.bf16.mxu0 0
        %608 = vmatpush2.bf16.msra.mxu0 0
        %609 = vmatprep.subr.bf16.mxu0 0
        %610 = vmatpush2.bf16.msra.mxu0 0
        %611 = vmatprep.subr.bf16.mxu0 0
        %612 = vmatpush2.bf16.msra.mxu0 0
        %613 = vmatprep.subr.bf16.mxu0 0
        %614 = vmatpush2.bf16.msra.mxu0 0
        %615 = vmatprep.subr.bf16.mxu0 0
        %616 = vmatpush2.bf16.msra.mxu0 0
        %617 = vmatprep.subr.bf16.mxu0 0
        %618 = vmatpush2.bf16.msra.mxu0 0
        %619 = vmatprep.mubr.bf16.mxu0 0
        %620 = vmatmul.mubr.bf16.gmra.mxu0 %v581
        %v621 = vpop.f32.mrf.mxu0
        %v622 = vadd.f32 0.0, %v621
        %v623 = vpop.f32.mrf.mxu0
        %v624 = vpop.f32.mrf.mxu0
        %v625 = vpop.f32.mrf.mxu0
        %626 = vdwg.mxu0
        %627 = vrot.lane.b32.xlu0 %v514, 120
        %v628 = vpop.permute.xlu0 %627
        %629 = vrot.lane.b32.xlu0 %v514, 88
        %v630 = vpop.permute.xlu0 %629
        %v632 = vsel %vm518, %v628, 0
        %v635 = vsel %vm518, %v630, 0
        %637 = vmatprep.subr.bf16.mxu0 0
        %638 = vmatpush1.bf16.xpose.msra.mxu0 0
        %639 = vmatprep.subr.bf16.mxu0 0
        %640 = vmatpush1.bf16.xpose.msra.mxu0 0
        %641 = vmatprep.subr.bf16.mxu0 0
        %642 = vmatpush1.bf16.xpose.msra.mxu0 0
        %643 = vmatprep.subr.bf16.mxu0 0
        %644 = vmatpush1.bf16.xpose.msra.mxu0 0
        %645 = vmatprep.subr.bf16.mxu0 0
        %646 = vmatpush1.bf16.xpose.msra.mxu0 0
        %647 = vmatprep.subr.bf16.mxu0 0
        %648 = vmatpush1.bf16.xpose.msra.mxu0 0
        %649 = vmatprep.subr.bf16.mxu0 0
        %650 = vmatpush1.bf16.xpose.msra.mxu0 0
        %651 = vmatprep.subr.bf16.mxu0 0
        %652 = vmatpush1.bf16.xpose.msra.mxu0 %v635
        %653 = vmatprep.subr.bf16.mxu0 0
        %654 = vmatpush2.bf16.xpose.msra.mxu0 0
        %655 = vmatprep.subr.bf16.mxu0 0
        %656 = vmatpush2.bf16.xpose.msra.mxu0 0
        %657 = vmatprep.subr.bf16.mxu0 0
        %658 = vmatpush2.bf16.xpose.msra.mxu0 0
        %659 = vmatprep.subr.bf16.mxu0 0
        %660 = vmatpush2.bf16.xpose.msra.mxu0 0
        %661 = vmatprep.subr.bf16.mxu0 0
        %662 = vmatpush2.bf16.xpose.msra.mxu0 0
        %663 = vmatprep.subr.bf16.mxu0 0
        %664 = vmatpush2.bf16.xpose.msra.mxu0 0
        %665 = vmatprep.subr.bf16.mxu0 0
        %666 = vmatpush2.bf16.xpose.msra.mxu0 0
        %667 = vmatprep.subr.bf16.mxu0 0
        %668 = vmatpush2.bf16.xpose.msra.mxu0 0
        %669 = vmatprep.mubr.bf16.mxu0 0
        %670 = vmatmul.mubr.bf16.gmra.mxu0 %v632
        %v671 = vpop.f32.mrf.mxu0
        %v672 = vadd.f32 0.0, %v671
        %v673 = vpop.f32.mrf.mxu0
        %v674 = vpop.f32.mrf.mxu0
        %v675 = vpop.f32.mrf.mxu0
        %676 = vdwg.mxu0
        %v677 = vmul.f32 %v672, 0.35355338
        %v678 = vsel %vm518, %v677, -inf
        %679 = vmax.xlane.f32.xlu0 %v678
        %v680 = vpop.xlane.xlu0 %679
        %v681 = vsub.f32 %v677, %v680
        %v682 = vmul.f32 %v681, 1.442695
        %v683 = vpow.pop %v682
        %v684 = vsel %vm518, %v683, 0.0
        %685 = vadd.xlane.f32.xlu0 %v684
        %v686 = vpop.xlane.xlu0 %685
        %v687 = vrcp.pop %v686
        %v688 = vmul.f32 %v683, %v687
        %v689 = vpack.c.bf16 %v688, %v688
        %690 = vrot.lane.b32.xlu0 %v514, 56
        %v691 = vpop.permute.xlu0 %690
        %v693 = vsel %vm518, %v689, 0
        %v696 = vsel %vm583, %v691, 0
        %698 = vmatprep.subr.bf16.mxu0 0
        %699 = vmatpush1.bf16.msra.mxu0 0
        %700 = vmatprep.subr.bf16.mxu0 0
        %701 = vmatpush1.bf16.msra.mxu0 0
        %702 = vmatprep.subr.bf16.mxu0 0
        %703 = vmatpush1.bf16.msra.mxu0 0
        %704 = vmatprep.subr.bf16.mxu0 0
        %705 = vmatpush1.bf16.msra.mxu0 0
        %706 = vmatprep.subr.bf16.mxu0 0
        %707 = vmatpush1.bf16.msra.mxu0 0
        %708 = vmatprep.subr.bf16.mxu0 0
        %709 = vmatpush1.bf16.msra.mxu0 0
        %710 = vmatprep.subr.bf16.mxu0 0
        %711 = vmatpush1.bf16.msra.mxu0 0
        %712 = vmatprep.subr.bf16.mxu0 0
        %713 = vmatpush1.bf16.msra.mxu0 %v696
        %714 = vmatprep.subr.bf16.mxu0 0
        %715 = vmatpush2.bf16.msra.mxu0 0
        %716 = vmatprep.subr.bf16.mxu0 0
        %717 = vmatpush2.bf16.msra.mxu0 0
        %718 = vmatprep.subr.bf16.mxu0 0
        %719 = vmatpush2.bf16.msra.mxu0 0
        %720 = vmatprep.subr.bf16.mxu0 0
        %721 = vmatpush2.bf16.msra.mxu0 0
        %722 = vmatprep.subr.bf16.mxu0 0
        %723 = vmatpush2.bf16.msra.mxu0 0
        %724 = vmatprep.subr.bf16.mxu0 0
        %725 = vmatpush2.bf16.msra.mxu0 0
        %726 = vmatprep.subr.bf16.mxu0 0
        %727 = vmatpush2.bf16.msra.mxu0 0
        %728 = vmatprep.subr.bf16.mxu0 0
        %729 = vmatpush2.bf16.msra.mxu0 0
        %730 = vmatprep.mubr.bf16.mxu0 0
        %731 = vmatmul.mubr.bf16.gmra.mxu0 %v693
        %v732 = vpop.f32.mrf.mxu0
        %v733 = vadd.f32 0.0, %v732
        %v734 = vpop.f32.mrf.mxu0
        %v735 = vpop.f32.mrf.mxu0
        %v736 = vpop.f32.mrf.mxu0
        %737 = vdwg.mxu0
        %738 = vrot.lane.b32.xlu0 %v514, 112
        %v739 = vpop.permute.xlu0 %738
        %740 = vrot.lane.b32.xlu0 %v514, 80
        %v741 = vpop.permute.xlu0 %740
        %v743 = vsel %vm518, %v739, 0
        %v746 = vsel %vm518, %v741, 0
        %748 = vmatprep.subr.bf16.mxu0 0
        %749 = vmatpush1.bf16.xpose.msra.mxu0 0
        %750 = vmatprep.subr.bf16.mxu0 0
        %751 = vmatpush1.bf16.xpose.msra.mxu0 0
        %752 = vmatprep.subr.bf16.mxu0 0
        %753 = vmatpush1.bf16.xpose.msra.mxu0 0
        %754 = vmatprep.subr.bf16.mxu0 0
        %755 = vmatpush1.bf16.xpose.msra.mxu0 0
        %756 = vmatprep.subr.bf16.mxu0 0
        %757 = vmatpush1.bf16.xpose.msra.mxu0 0
        %758 = vmatprep.subr.bf16.mxu0 0
        %759 = vmatpush1.bf16.xpose.msra.mxu0 0
        %760 = vmatprep.subr.bf16.mxu0 0
        %761 = vmatpush1.bf16.xpose.msra.mxu0 0
        %762 = vmatprep.subr.bf16.mxu0 0
        %763 = vmatpush1.bf16.xpose.msra.mxu0 %v746
        %764 = vmatprep.subr.bf16.mxu0 0
        %765 = vmatpush2.bf16.xpose.msra.mxu0 0
        %766 = vmatprep.subr.bf16.mxu0 0
        %767 = vmatpush2.bf16.xpose.msra.mxu0 0
        %768 = vmatprep.subr.bf16.mxu0 0
        %769 = vmatpush2.bf16.xpose.msra.mxu0 0
        %770 = vmatprep.subr.bf16.mxu0 0
        %771 = vmatpush2.bf16.xpose.msra.mxu0 0
        %772 = vmatprep.subr.bf16.mxu0 0
        %773 = vmatpush2.bf16.xpose.msra.mxu0 0
        %774 = vmatprep.subr.bf16.mxu0 0
        %775 = vmatpush2.bf16.xpose.msra.mxu0 0
        %776 = vmatprep.subr.bf16.mxu0 0
        %777 = vmatpush2.bf16.xpose.msra.mxu0 0
        %778 = vmatprep.subr.bf16.mxu0 0
        %779 = vmatpush2.bf16.xpose.msra.mxu0 0
        %780 = vmatprep.mubr.bf16.mxu0 0
        %781 = vmatmul.mubr.bf16.gmra.mxu0 %v743
        %v782 = vpop.f32.mrf.mxu0
        %v783 = vadd.f32 0.0, %v782
        %v784 = vpop.f32.mrf.mxu0
        %v785 = vpop.f32.mrf.mxu0
        %v786 = vpop.f32.mrf.mxu0
        %787 = vdwg.mxu0
        %v788 = vmul.f32 %v783, 0.35355338
        %v789 = vsel %vm518, %v788, -inf
        %790 = vmax.xlane.f32.xlu0 %v789
        %v791 = vpop.xlane.xlu0 %790
        %v792 = vsub.f32 %v788, %v791
        %v793 = vmul.f32 %v792, 1.442695
        %v794 = vpow.pop %v793
        %v795 = vsel %vm518, %v794, 0.0
        %796 = vadd.xlane.f32.xlu0 %v795
        %v797 = vpop.xlane.xlu0 %796
        %v798 = vrcp.pop %v797
        %v799 = vmul.f32 %v794, %v798
        %v800 = vpack.c.bf16 %v799, %v799
        %801 = vrot.lane.b32.xlu0 %v514, 48
        %v802 = vpop.permute.xlu0 %801
        %v804 = vsel %vm518, %v800, 0
        %v807 = vsel %vm583, %v802, 0
        %809 = vmatprep.subr.bf16.mxu0 0
        %810 = vmatpush1.bf16.msra.mxu0 0
        %811 = vmatprep.subr.bf16.mxu0 0
        %812 = vmatpush1.bf16.msra.mxu0 0
        %813 = vmatprep.subr.bf16.mxu0 0
        %814 = vmatpush1.bf16.msra.mxu0 0
        %815 = vmatprep.subr.bf16.mxu0 0
        %816 = vmatpush1.bf16.msra.mxu0 0
        %817 = vmatprep.subr.bf16.mxu0 0
        %818 = vmatpush1.bf16.msra.mxu0 0
        %819 = vmatprep.subr.bf16.mxu0 0
        %820 = vmatpush1.bf16.msra.mxu0 0
        %821 = vmatprep.subr.bf16.mxu0 0
        %822 = vmatpush1.bf16.msra.mxu0 0
        %823 = vmatprep.subr.bf16.mxu0 0
        %824 = vmatpush1.bf16.msra.mxu0 %v807
        %825 = vmatprep.subr.bf16.mxu0 0
        %826 = vmatpush2.bf16.msra.mxu0 0
        %827 = vmatprep.subr.bf16.mxu0 0
        %828 = vmatpush2.bf16.msra.mxu0 0
        %829 = vmatprep.subr.bf16.mxu0 0
        %830 = vmatpush2.bf16.msra.mxu0 0
        %831 = vmatprep.subr.bf16.mxu0 0
        %832 = vmatpush2.bf16.msra.mxu0 0
        %833 = vmatprep.subr.bf16.mxu0 0
        %834 = vmatpush2.bf16.msra.mxu0 0
        %835 = vmatprep.subr.bf16.mxu0 0
        %836 = vmatpush2.bf16.msra.mxu0 0
        %837 = vmatprep.subr.bf16.mxu0 0
        %838 = vmatpush2.bf16.msra.mxu0 0
        %839 = vmatprep.subr.bf16.mxu0 0
        %840 = vmatpush2.bf16.msra.mxu0 0
        %841 = vmatprep.mubr.bf16.mxu0 0
        %842 = vmatmul.mubr.bf16.gmra.mxu0 %v804
        %v843 = vpop.f32.mrf.mxu0
        %v844 = vadd.f32 0.0, %v843
        %v845 = vpop.f32.mrf.mxu0
        %v846 = vpop.f32.mrf.mxu0
        %v847 = vpop.f32.mrf.mxu0
        %848 = vdwg.mxu0
        %849 = vrot.lane.b32.xlu0 %v514, 104
        %v850 = vpop.permute.xlu0 %849
        %851 = vrot.lane.b32.xlu0 %v514, 72
        %v852 = vpop.permute.xlu0 %851
        %v854 = vsel %vm518, %v850, 0
        %v857 = vsel %vm518, %v852, 0
        %859 = vmatprep.subr.bf16.mxu0 0
        %860 = vmatpush1.bf16.xpose.msra.mxu0 0
        %861 = vmatprep.subr.bf16.mxu0 0
        %862 = vmatpush1.bf16.xpose.msra.mxu0 0
        %863 = vmatprep.subr.bf16.mxu0 0
        %864 = vmatpush1.bf16.xpose.msra.mxu0 0
        %865 = vmatprep.subr.bf16.mxu0 0
        %866 = vmatpush1.bf16.xpose.msra.mxu0 0
        %867 = vmatprep.subr.bf16.mxu0 0
        %868 = vmatpush1.bf16.xpose.msra.mxu0 0
        %869 = vmatprep.subr.bf16.mxu0 0
        %870 = vmatpush1.bf16.xpose.msra.mxu0 0
        %871 = vmatprep.subr.bf16.mxu0 0
        %872 = vmatpush1.bf16.xpose.msra.mxu0 0
        %873 = vmatprep.subr.bf16.mxu0 0
        %874 = vmatpush1.bf16.xpose.msra.mxu0 %v857
        %875 = vmatprep.subr.bf16.mxu0 0
        %876 = vmatpush2.bf16.xpose.msra.mxu0 0
        %877 = vmatprep.subr.bf16.mxu0 0
        %878 = vmatpush2.bf16.xpose.msra.mxu0 0
        %879 = vmatprep.subr.bf16.mxu0 0
        %880 = vmatpush2.bf16.xpose.msra.mxu0 0
        %881 = vmatprep.subr.bf16.mxu0 0
        %882 = vmatpush2.bf16.xpose.msra.mxu0 0
        %883 = vmatprep.subr.bf16.mxu0 0
        %884 = vmatpush2.bf16.xpose.msra.mxu0 0
        %885 = vmatprep.subr.bf16.mxu0 0
        %886 = vmatpush2.bf16.xpose.msra.mxu0 0
        %887 = vmatprep.subr.bf16.mxu0 0
        %888 = vmatpush2.bf16.xpose.msra.mxu0 0
        %889 = vmatprep.subr.bf16.mxu0 0
        %890 = vmatpush2.bf16.xpose.msra.mxu0 0
        %891 = vmatprep.mubr.bf16.mxu0 0
        %892 = vmatmul.mubr.bf16.gmra.mxu0 %v854
        %v893 = vpop.f32.mrf.mxu0
        %v894 = vadd.f32 0.0, %v893
        %v895 = vpop.f32.mrf.mxu0
        %v896 = vpop.f32.mrf.mxu0
        %v897 = vpop.f32.mrf.mxu0
        %898 = vdwg.mxu0
        %v899 = vmul.f32 %v894, 0.35355338
        %v900 = vsel %vm518, %v899, -inf
        %901 = vmax.xlane.f32.xlu0 %v900
        %v902 = vpop.xlane.xlu0 %901
        %v903 = vsub.f32 %v899, %v902
        %v904 = vmul.f32 %v903, 1.442695
        %v905 = vpow.pop %v904
        %v906 = vsel %vm518, %v905, 0.0
        %907 = vadd.xlane.f32.xlu0 %v906
        %v908 = vpop.xlane.xlu0 %907
        %v909 = vrcp.pop %v908
        %v910 = vmul.f32 %v905, %v909
        %v911 = vpack.c.bf16 %v910, %v910
        %912 = vrot.lane.b32.xlu0 %v514, 40
        %v913 = vpop.permute.xlu0 %912
        %v915 = vsel %vm518, %v911, 0
        %v918 = vsel %vm583, %v913, 0
        %920 = vmatprep.subr.bf16.mxu0 0
        %921 = vmatpush1.bf16.msra.mxu0 0
        %922 = vmatprep.subr.bf16.mxu0 0
        %923 = vmatpush1.bf16.msra.mxu0 0
        %924 = vmatprep.subr.bf16.mxu0 0
        %925 = vmatpush1.bf16.msra.mxu0 0
        %926 = vmatprep.subr.bf16.mxu0 0
        %927 = vmatpush1.bf16.msra.mxu0 0
        %928 = vmatprep.subr.bf16.mxu0 0
        %929 = vmatpush1.bf16.msra.mxu0 0
        %930 = vmatprep.subr.bf16.mxu0 0
        %931 = vmatpush1.bf16.msra.mxu0 0
        %932 = vmatprep.subr.bf16.mxu0 0
        %933 = vmatpush1.bf16.msra.mxu0 0
        %934 = vmatprep.subr.bf16.mxu0 0
        %935 = vmatpush1.bf16.msra.mxu0 %v918
        %936 = vmatprep.subr.bf16.mxu0 0
        %937 = vmatpush2.bf16.msra.mxu0 0
        %938 = vmatprep.subr.bf16.mxu0 0
        %939 = vmatpush2.bf16.msra.mxu0 0
        %940 = vmatprep.subr.bf16.mxu0 0
        %941 = vmatpush2.bf16.msra.mxu0 0
        %942 = vmatprep.subr.bf16.mxu0 0
        %943 = vmatpush2.bf16.msra.mxu0 0
        %944 = vmatprep.subr.bf16.mxu0 0
        %945 = vmatpush2.bf16.msra.mxu0 0
        %946 = vmatprep.subr.bf16.mxu0 0
        %947 = vmatpush2.bf16.msra.mxu0 0
        %948 = vmatprep.subr.bf16.mxu0 0
        %949 = vmatpush2.bf16.msra.mxu0 0
        %950 = vmatprep.subr.bf16.mxu0 0
        %951 = vmatpush2.bf16.msra.mxu0 0
        %952 = vmatprep.mubr.bf16.mxu0 0
        %953 = vmatmul.mubr.bf16.gmra.mxu0 %v915
        %v954 = vpop.f32.mrf.mxu0
        %v955 = vadd.f32 0.0, %v954
        %v956 = vpop.f32.mrf.mxu0
        %v957 = vpop.f32.mrf.mxu0
        %v958 = vpop.f32.mrf.mxu0
        %959 = vdwg.mxu0
        %961 = vrot.lane.b32.xlu0 %v733, 8
        %v962 = vpop.permute.xlu0 %961
        %965 = vrot.lane.b32.xlu0 %v844, 16
        %v966 = vpop.permute.xlu0 %965
        %969 = vrot.lane.b32.xlu0 %v955, 24
        %v970 = vpop.permute.xlu0 %969
        %v972 = vsel %vm518, %v622, %v962
        %vm973 = vcmask 130048
        %v974 = vsel %vm973, %v972, %v966
        %vm975 = vcmask 195584
        %v976 = vsel %vm975, %v974, %v970
        %v977 = vrot.slane %v514, 4
        %978 = vrot.lane.b32.xlu0 %v977, 96
        %v979 = vpop.permute.xlu0 %978
        %v981 = vsel %vm518, %v977, 0
        %v984 = vsel %vm518, %v979, 0
        %986 = vmatprep.subr.bf16.mxu0 0
        %987 = vmatpush1.bf16.xpose.msra.mxu0 0
        %988 = vmatprep.subr.bf16.mxu0 0
        %989 = vmatpush1.bf16.xpose.msra.mxu0 0
        %990 = vmatprep.subr.bf16.mxu0 0
        %991 = vmatpush1.bf16.xpose.msra.mxu0 0
        %992 = vmatprep.subr.bf16.mxu0 0
        %993 = vmatpush1.bf16.xpose.msra.mxu0 0
        %994 = vmatprep.subr.bf16.mxu0 0
        %995 = vmatpush1.bf16.xpose.msra.mxu0 0
        %996 = vmatprep.subr.bf16.mxu0 0
        %997 = vmatpush1.bf16.xpose.msra.mxu0 0
        %998 = vmatprep.subr.bf16.mxu0 0
        %999 = vmatpush1.bf16.xpose.msra.mxu0 0
        %1000 = vmatprep.subr.bf16.mxu0 0
        %1001 = vmatpush1.bf16.xpose.msra.mxu0 %v984
        %1002 = vmatprep.subr.bf16.mxu0 0
        %1003 = vmatpush2.bf16.xpose.msra.mxu0 0
        %1004 = vmatprep.subr.bf16.mxu0 0
        %1005 = vmatpush2.bf16.xpose.msra.mxu0 0
        %1006 = vmatprep.subr.bf16.mxu0 0
        %1007 = vmatpush2.bf16.xpose.msra.mxu0 0
        %1008 = vmatprep.subr.bf16.mxu0 0
        %1009 = vmatpush2.bf16.xpose.msra.mxu0 0
        %1010 = vmatprep.subr.bf16.mxu0 0
        %1011 = vmatpush2.bf16.xpose.msra.mxu0 0
        %1012 = vmatprep.subr.bf16.mxu0 0
        %1013 = vmatpush2.bf16.xpose.msra.mxu0 0
        %1014 = vmatprep.subr.bf16.mxu0 0
        %1015 = vmatpush2.bf16.xpose.msra.mxu0 0
        %1016 = vmatprep.subr.bf16.mxu0 0
        %1017 = vmatpush2.bf16.xpose.msra.mxu0 0
        %1018 = vmatprep.mubr.bf16.mxu0 0
        %1019 = vmatmul.mubr.bf16.gmra.mxu0 %v981
        %v1020 = vpop.f32.mrf.mxu0
        %v1021 = vadd.f32 0.0, %v1020
        %v1022 = vpop.f32.mrf.mxu0
        %v1023 = vpop.f32.mrf.mxu0
        %v1024 = vpop.f32.mrf.mxu0
        %1025 = vdwg.mxu0
        %v1026 = vmul.f32 %v1021, 0.35355338
        %v1027 = vsel %vm518, %v1026, -inf
        %1028 = vmax.xlane.f32.xlu0 %v1027
        %v1029 = vpop.xlane.xlu0 %1028
        %v1030 = vsub.f32 %v1026, %v1029
        %v1031 = vmul.f32 %v1030, 1.442695
        %v1032 = vpow.pop %v1031
        %v1033 = vsel %vm518, %v1032, 0.0
        %1034 = vadd.xlane.f32.xlu0 %v1033
        %v1035 = vpop.xlane.xlu0 %1034
        %v1036 = vrcp.pop %v1035
        %v1037 = vmul.f32 %v1032, %v1036
        %v1038 = vpack.c.bf16 %v1037, %v1037
        %1039 = vrot.lane.b32.xlu0 %v977, 64
        %v1040 = vpop.permute.xlu0 %1039
        %v1042 = vsel %vm518, %v1038, 0
        %v1045 = vsel %vm583, %v1040, 0
        %1047 = vmatprep.subr.bf16.mxu0 0
        %1048 = vmatpush1.bf16.msra.mxu0 0
        %1049 = vmatprep.subr.bf16.mxu0 0
        %1050 = vmatpush1.bf16.msra.mxu0 0
        %1051 = vmatprep.subr.bf16.mxu0 0
        %1052 = vmatpush1.bf16.msra.mxu0 0
        %1053 = vmatprep.subr.bf16.mxu0 0
        %1054 = vmatpush1.bf16.msra.mxu0 0
        %1055 = vmatprep.subr.bf16.mxu0 0
        %1056 = vmatpush1.bf16.msra.mxu0 0
        %1057 = vmatprep.subr.bf16.mxu0 0
        %1058 = vmatpush1.bf16.msra.mxu0 0
        %1059 = vmatprep.subr.bf16.mxu0 0
        %1060 = vmatpush1.bf16.msra.mxu0 0
        %1061 = vmatprep.subr.bf16.mxu0 0
        %1062 = vmatpush1.bf16.msra.mxu0 %v1045
        %1063 = vmatprep.subr.bf16.mxu0 0
        %1064 = vmatpush2.bf16.msra.mxu0 0
        %1065 = vmatprep.subr.bf16.mxu0 0
        %1066 = vmatpush2.bf16.msra.mxu0 0
        %1067 = vmatprep.subr.bf16.mxu0 0
        %1068 = vmatpush2.bf16.msra.mxu0 0
        %1069 = vmatprep.subr.bf16.mxu0 0
        %1070 = vmatpush2.bf16.msra.mxu0 0
        %1071 = vmatprep.subr.bf16.mxu0 0
        %1072 = vmatpush2.bf16.msra.mxu0 0
        %1073 = vmatprep.subr.bf16.mxu0 0
        %1074 = vmatpush2.bf16.msra.mxu0 0
        %1075 = vmatprep.subr.bf16.mxu0 0
        %1076 = vmatpush2.bf16.msra.mxu0 0
        %1077 = vmatprep.subr.bf16.mxu0 0
        %1078 = vmatpush2.bf16.msra.mxu0 0
        %1079 = vmatprep.mubr.bf16.mxu0 0
        %1080 = vmatmul.mubr.bf16.gmra.mxu0 %v1042
        %v1081 = vpop.f32.mrf.mxu0
        %v1082 = vadd.f32 0.0, %v1081
        %v1083 = vpop.f32.mrf.mxu0
        %v1084 = vpop.f32.mrf.mxu0
        %v1085 = vpop.f32.mrf.mxu0
        %1086 = vdwg.mxu0
        %1087 = vrot.lane.b32.xlu0 %v977, 120
        %v1088 = vpop.permute.xlu0 %1087
        %1089 = vrot.lane.b32.xlu0 %v977, 88
        %v1090 = vpop.permute.xlu0 %1089
        %v1092 = vsel %vm518, %v1088, 0
        %v1095 = vsel %vm518, %v1090, 0
        %1097 = vmatprep.subr.bf16.mxu0 0
        %1098 = vmatpush1.bf16.xpose.msra.mxu0 0
        %1099 = vmatprep.subr.bf16.mxu0 0
        %1100 = vmatpush1.bf16.xpose.msra.mxu0 0
        %1101 = vmatprep.subr.bf16.mxu0 0
        %1102 = vmatpush1.bf16.xpose.msra.mxu0 0
        %1103 = vmatprep.subr.bf16.mxu0 0
        %1104 = vmatpush1.bf16.xpose.msra.mxu0 0
        %1105 = vmatprep.subr.bf16.mxu0 0
        %1106 = vmatpush1.bf16.xpose.msra.mxu0 0
        %1107 = vmatprep.subr.bf16.mxu0 0
        %1108 = vmatpush1.bf16.xpose.msra.mxu0 0
        %1109 = vmatprep.subr.bf16.mxu0 0
        %1110 = vmatpush1.bf16.xpose.msra.mxu0 0
        %1111 = vmatprep.subr.bf16.mxu0 0
        %1112 = vmatpush1.bf16.xpose.msra.mxu0 %v1095
        %1113 = vmatprep.subr.bf16.mxu0 0
        %1114 = vmatpush2.bf16.xpose.msra.mxu0 0
        %1115 = vmatprep.subr.bf16.mxu0 0
        %1116 = vmatpush2.bf16.xpose.msra.mxu0 0
        %1117 = vmatprep.subr.bf16.mxu0 0
        %1118 = vmatpush2.bf16.xpose.msra.mxu0 0
        %1119 = vmatprep.subr.bf16.mxu0 0
        %1120 = vmatpush2.bf16.xpose.msra.mxu0 0
        %1121 = vmatprep.subr.bf16.mxu0 0
        %1122 = vmatpush2.bf16.xpose.msra.mxu0 0
        %1123 = vmatprep.subr.bf16.mxu0 0
        %1124 = vmatpush2.bf16.xpose.msra.mxu0 0
        %1125 = vmatprep.subr.bf16.mxu0 0
        %1126 = vmatpush2.bf16.xpose.msra.mxu0 0
        %1127 = vmatprep.subr.bf16.mxu0 0
        %1128 = vmatpush2.bf16.xpose.msra.mxu0 0
        %1129 = vmatprep.mubr.bf16.mxu0 0
        %1130 = vmatmul.mubr.bf16.gmra.mxu0 %v1092
        %v1131 = vpop.f32.mrf.mxu0
        %v1132 = vadd.f32 0.0, %v1131
        %v1133 = vpop.f32.mrf.mxu0
        %v1134 = vpop.f32.mrf.mxu0
        %v1135 = vpop.f32.mrf.mxu0
        %1136 = vdwg.mxu0
        %v1137 = vmul.f32 %v1132, 0.35355338
        %v1138 = vsel %vm518, %v1137, -inf
        %1139 = vmax.xlane.f32.xlu0 %v1138
        %v1140 = vpop.xlane.xlu0 %1139
        %v1141 = vsub.f32 %v1137, %v1140
        %v1142 = vmul.f32 %v1141, 1.442695
        %v1143 = vpow.pop %v1142
        %v1144 = vsel %vm518, %v1143, 0.0
        %1145 = vadd.xlane.f32.xlu0 %v1144
        %v1146 = vpop.xlane.xlu0 %1145
        %v1147 = vrcp.pop %v1146
        %v1148 = vmul.f32 %v1143, %v1147
        %v1149 = vpack.c.bf16 %v1148, %v1148
        %1150 = vrot.lane.b32.xlu0 %v977, 56
        %v1151 = vpop.permute.xlu0 %1150
        %v1153 = vsel %vm518, %v1149, 0
        %v1156 = vsel %vm583, %v1151, 0
        %1158 = vmatprep.subr.bf16.mxu0 0
        %1159 = vmatpush1.bf16.msra.mxu0 0
        %1160 = vmatprep.subr.bf16.mxu0 0
        %1161 = vmatpush1.bf16.msra.mxu0 0
        %1162 = vmatprep.subr.bf16.mxu0 0
        %1163 = vmatpush1.bf16.msra.mxu0 0
        %1164 = vmatprep.subr.bf16.mxu0 0
        %1165 = vmatpush1.bf16.msra.mxu0 0
        %1166 = vmatprep.subr.bf16.mxu0 0
        %1167 = vmatpush1.bf16.msra.mxu0 0
        %1168 = vmatprep.subr.bf16.mxu0 0
        %1169 = vmatpush1.bf16.msra.mxu0 0
        %1170 = vmatprep.subr.bf16.mxu0 0
        %1171 = vmatpush1.bf16.msra.mxu0 0
        %1172 = vmatprep.subr.bf16.mxu0 0
        %1173 = vmatpush1.bf16.msra.mxu0 %v1156
        %1174 = vmatprep.subr.bf16.mxu0 0
        %1175 = vmatpush2.bf16.msra.mxu0 0
        %1176 = vmatprep.subr.bf16.mxu0 0
        %1177 = vmatpush2.bf16.msra.mxu0 0
        %1178 = vmatprep.subr.bf16.mxu0 0
        %1179 = vmatpush2.bf16.msra.mxu0 0
        %1180 = vmatprep.subr.bf16.mxu0 0
        %1181 = vmatpush2.bf16.msra.mxu0 0
        %1182 = vmatprep.subr.bf16.mxu0 0
        %1183 = vmatpush2.bf16.msra.mxu0 0
        %1184 = vmatprep.subr.bf16.mxu0 0
        %1185 = vmatpush2.bf16.msra.mxu0 0
        %1186 = vmatprep.subr.bf16.mxu0 0
        %1187 = vmatpush2.bf16.msra.mxu0 0
        %1188 = vmatprep.subr.bf16.mxu0 0
        %1189 = vmatpush2.bf16.msra.mxu0 0
        %1190 = vmatprep.mubr.bf16.mxu0 0
        %1191 = vmatmul.mubr.bf16.gmra.mxu0 %v1153
        %v1192 = vpop.f32.mrf.mxu0
        %v1193 = vadd.f32 0.0, %v1192
        %v1194 = vpop.f32.mrf.mxu0
        %v1195 = vpop.f32.mrf.mxu0
        %v1196 = vpop.f32.mrf.mxu0
        %1197 = vdwg.mxu0
        %1198 = vrot.lane.b32.xlu0 %v977, 112
        %v1199 = vpop.permute.xlu0 %1198
        %1200 = vrot.lane.b32.xlu0 %v977, 80
        %v1201 = vpop.permute.xlu0 %1200
        %v1203 = vsel %vm518, %v1199, 0
        %v1206 = vsel %vm518, %v1201, 0
        %1208 = vmatprep.subr.bf16.mxu0 0
        %1209 = vmatpush1.bf16.xpose.msra.mxu0 0
        %1210 = vmatprep.subr.bf16.mxu0 0
        %1211 = vmatpush1.bf16.xpose.msra.mxu0 0
        %1212 = vmatprep.subr.bf16.mxu0 0
        %1213 = vmatpush1.bf16.xpose.msra.mxu0 0
        %1214 = vmatprep.subr.bf16.mxu0 0
        %1215 = vmatpush1.bf16.xpose.msra.mxu0 0
        %1216 = vmatprep.subr.bf16.mxu0 0
        %1217 = vmatpush1.bf16.xpose.msra.mxu0 0
        %1218 = vmatprep.subr.bf16.mxu0 0
        %1219 = vmatpush1.bf16.xpose.msra.mxu0 0
        %1220 = vmatprep.subr.bf16.mxu0 0
        %1221 = vmatpush1.bf16.xpose.msra.mxu0 0
        %1222 = vmatprep.subr.bf16.mxu0 0
        %1223 = vmatpush1.bf16.xpose.msra.mxu0 %v1206
        %1224 = vmatprep.subr.bf16.mxu0 0
        %1225 = vmatpush2.bf16.xpose.msra.mxu0 0
        %1226 = vmatprep.subr.bf16.mxu0 0
        %1227 = vmatpush2.bf16.xpose.msra.mxu0 0
        %1228 = vmatprep.subr.bf16.mxu0 0
        %1229 = vmatpush2.bf16.xpose.msra.mxu0 0
        %1230 = vmatprep.subr.bf16.mxu0 0
        %1231 = vmatpush2.bf16.xpose.msra.mxu0 0
        %1232 = vmatprep.subr.bf16.mxu0 0
        %1233 = vmatpush2.bf16.xpose.msra.mxu0 0
        %1234 = vmatprep.subr.bf16.mxu0 0
        %1235 = vmatpush2.bf16.xpose.msra.mxu0 0
        %1236 = vmatprep.subr.bf16.mxu0 0
        %1237 = vmatpush2.bf16.xpose.msra.mxu0 0
        %1238 = vmatprep.subr.bf16.mxu0 0
        %1239 = vmatpush2.bf16.xpose.msra.mxu0 0
        %1240 = vmatprep.mubr.bf16.mxu0 0
        %1241 = vmatmul.mubr.bf16.gmra.mxu0 %v1203
        %v1242 = vpop.f32.mrf.mxu0
        %v1243 = vadd.f32 0.0, %v1242
        %v1244 = vpop.f32.mrf.mxu0
        %v1245 = vpop.f32.mrf.mxu0
        %v1246 = vpop.f32.mrf.mxu0
        %1247 = vdwg.mxu0
        %v1248 = vmul.f32 %v1243, 0.35355338
        %v1249 = vsel %vm518, %v1248, -inf
        %1250 = vmax.xlane.f32.xlu0 %v1249
        %v1251 = vpop.xlane.xlu0 %1250
        %v1252 = vsub.f32 %v1248, %v1251
        %v1253 = vmul.f32 %v1252, 1.442695
        %v1254 = vpow.pop %v1253
        %v1255 = vsel %vm518, %v1254, 0.0
        %1256 = vadd.xlane.f32.xlu0 %v1255
        %v1257 = vpop.xlane.xlu0 %1256
        %v1258 = vrcp.pop %v1257
        %v1259 = vmul.f32 %v1254, %v1258
        %v1260 = vpack.c.bf16 %v1259, %v1259
        %1261 = vrot.lane.b32.xlu0 %v977, 48
        %v1262 = vpop.permute.xlu0 %1261
        %v1264 = vsel %vm518, %v1260, 0
        %v1267 = vsel %vm583, %v1262, 0
        %1269 = vmatprep.subr.bf16.mxu0 0
        %1270 = vmatpush1.bf16.msra.mxu0 0
        %1271 = vmatprep.subr.bf16.mxu0 0
        %1272 = vmatpush1.bf16.msra.mxu0 0
        %1273 = vmatprep.subr.bf16.mxu0 0
        %1274 = vmatpush1.bf16.msra.mxu0 0
        %1275 = vmatprep.subr.bf16.mxu0 0
        %1276 = vmatpush1.bf16.msra.mxu0 0
        %1277 = vmatprep.subr.bf16.mxu0 0
        %1278 = vmatpush1.bf16.msra.mxu0 0
        %1279 = vmatprep.subr.bf16.mxu0 0
        %1280 = vmatpush1.bf16.msra.mxu0 0
        %1281 = vmatprep.subr.bf16.mxu0 0
        %1282 = vmatpush1.bf16.msra.mxu0 0
        %1283 = vmatprep.subr.bf16.mxu0 0
        %1284 = vmatpush1.bf16.msra.mxu0 %v1267
        %1285 = vmatprep.subr.bf16.mxu0 0
        %1286 = vmatpush2.bf16.msra.mxu0 0
        %1287 = vmatprep.subr.bf16.mxu0 0
        %1288 = vmatpush2.bf16.msra.mxu0 0
        %1289 = vmatprep.subr.bf16.mxu0 0
        %1290 = vmatpush2.bf16.msra.mxu0 0
        %1291 = vmatprep.subr.bf16.mxu0 0
        %1292 = vmatpush2.bf16.msra.mxu0 0
        %1293 = vmatprep.subr.bf16.mxu0 0
        %1294 = vmatpush2.bf16.msra.mxu0 0
        %1295 = vmatprep.subr.bf16.mxu0 0
        %1296 = vmatpush2.bf16.msra.mxu0 0
        %1297 = vmatprep.subr.bf16.mxu0 0
        %1298 = vmatpush2.bf16.msra.mxu0 0
        %1299 = vmatprep.subr.bf16.mxu0 0
        %1300 = vmatpush2.bf16.msra.mxu0 0
        %1301 = vmatprep.mubr.bf16.mxu0 0
        %1302 = vmatmul.mubr.bf16.gmra.mxu0 %v1264
        %v1303 = vpop.f32.mrf.mxu0
        %v1304 = vadd.f32 0.0, %v1303
        %v1305 = vpop.f32.mrf.mxu0
        %v1306 = vpop.f32.mrf.mxu0
        %v1307 = vpop.f32.mrf.mxu0
        %1308 = vdwg.mxu0
        %1309 = vrot.lane.b32.xlu0 %v977, 104
        %v1310 = vpop.permute.xlu0 %1309
        %1311 = vrot.lane.b32.xlu0 %v977, 72
        %v1312 = vpop.permute.xlu0 %1311
        %v1314 = vsel %vm518, %v1310, 0
        %v1317 = vsel %vm518, %v1312, 0
        %1319 = vmatprep.subr.bf16.mxu0 0
        %1320 = vmatpush1.bf16.xpose.msra.mxu0 0
        %1321 = vmatprep.subr.bf16.mxu0 0
        %1322 = vmatpush1.bf16.xpose.msra.mxu0 0
        %1323 = vmatprep.subr.bf16.mxu0 0
        %1324 = vmatpush1.bf16.xpose.msra.mxu0 0
        %1325 = vmatprep.subr.bf16.mxu0 0
        %1326 = vmatpush1.bf16.xpose.msra.mxu0 0
        %1327 = vmatprep.subr.bf16.mxu0 0
        %1328 = vmatpush1.bf16.xpose.msra.mxu0 0
        %1329 = vmatprep.subr.bf16.mxu0 0
        %1330 = vmatpush1.bf16.xpose.msra.mxu0 0
        %1331 = vmatprep.subr.bf16.mxu0 0
        %1332 = vmatpush1.bf16.xpose.msra.mxu0 0
        %1333 = vmatprep.subr.bf16.mxu0 0
        %1334 = vmatpush1.bf16.xpose.msra.mxu0 %v1317
        %1335 = vmatprep.subr.bf16.mxu0 0
        %1336 = vmatpush2.bf16.xpose.msra.mxu0 0
        %1337 = vmatprep.subr.bf16.mxu0 0
        %1338 = vmatpush2.bf16.xpose.msra.mxu0 0
        %1339 = vmatprep.subr.bf16.mxu0 0
        %1340 = vmatpush2.bf16.xpose.msra.mxu0 0
        %1341 = vmatprep.subr.bf16.mxu0 0
        %1342 = vmatpush2.bf16.xpose.msra.mxu0 0
        %1343 = vmatprep.subr.bf16.mxu0 0
        %1344 = vmatpush2.bf16.xpose.msra.mxu0 0
        %1345 = vmatprep.subr.bf16.mxu0 0
        %1346 = vmatpush2.bf16.xpose.msra.mxu0 0
        %1347 = vmatprep.subr.bf16.mxu0 0
        %1348 = vmatpush2.bf16.xpose.msra.mxu0 0
        %1349 = vmatprep.subr.bf16.mxu0 0
        %1350 = vmatpush2.bf16.xpose.msra.mxu0 0
        %1351 = vmatprep.mubr.bf16.mxu0 0
        %1352 = vmatmul.mubr.bf16.gmra.mxu0 %v1314
        %v1353 = vpop.f32.mrf.mxu0
        %v1354 = vadd.f32 0.0, %v1353
        %v1355 = vpop.f32.mrf.mxu0
        %v1356 = vpop.f32.mrf.mxu0
        %v1357 = vpop.f32.mrf.mxu0
        %1358 = vdwg.mxu0
        %v1359 = vmul.f32 %v1354, 0.35355338
        %v1360 = vsel %vm518, %v1359, -inf
        %1361 = vmax.xlane.f32.xlu0 %v1360
        %v1362 = vpop.xlane.xlu0 %1361
        %v1363 = vsub.f32 %v1359, %v1362
        %v1364 = vmul.f32 %v1363, 1.442695
        %v1365 = vpow.pop %v1364
        %v1366 = vsel %vm518, %v1365, 0.0
        %1367 = vadd.xlane.f32.xlu0 %v1366
        %v1368 = vpop.xlane.xlu0 %1367
        %v1369 = vrcp.pop %v1368
        %v1370 = vmul.f32 %v1365, %v1369
        %v1371 = vpack.c.bf16 %v1370, %v1370
        %1372 = vrot.lane.b32.xlu0 %v977, 40
        %v1373 = vpop.permute.xlu0 %1372
        %v1375 = vsel %vm518, %v1371, 0
        %v1378 = vsel %vm583, %v1373, 0
        %1380 = vmatprep.subr.bf16.mxu0 0
        %1381 = vmatpush1.bf16.msra.mxu0 0
        %1382 = vmatprep.subr.bf16.mxu0 0
        %1383 = vmatpush1.bf16.msra.mxu0 0
        %1384 = vmatprep.subr.bf16.mxu0 0
        %1385 = vmatpush1.bf16.msra.mxu0 0
        %1386 = vmatprep.subr.bf16.mxu0 0
        %1387 = vmatpush1.bf16.msra.mxu0 0
        %1388 = vmatprep.subr.bf16.mxu0 0
        %1389 = vmatpush1.bf16.msra.mxu0 0
        %1390 = vmatprep.subr.bf16.mxu0 0
        %1391 = vmatpush1.bf16.msra.mxu0 0
        %1392 = vmatprep.subr.bf16.mxu0 0
        %1393 = vmatpush1.bf16.msra.mxu0 0
        %1394 = vmatprep.subr.bf16.mxu0 0
        %1395 = vmatpush1.bf16.msra.mxu0 %v1378
        %1396 = vmatprep.subr.bf16.mxu0 0
        %1397 = vmatpush2.bf16.msra.mxu0 0
        %1398 = vmatprep.subr.bf16.mxu0 0
        %1399 = vmatpush2.bf16.msra.mxu0 0
        %1400 = vmatprep.subr.bf16.mxu0 0
        %1401 = vmatpush2.bf16.msra.mxu0 0
        %1402 = vmatprep.subr.bf16.mxu0 0
        %1403 = vmatpush2.bf16.msra.mxu0 0
        %1404 = vmatprep.subr.bf16.mxu0 0
        %1405 = vmatpush2.bf16.msra.mxu0 0
        %1406 = vmatprep.subr.bf16.mxu0 0
        %1407 = vmatpush2.bf16.msra.mxu0 0
        %1408 = vmatprep.subr.bf16.mxu0 0
        %1409 = vmatpush2.bf16.msra.mxu0 0
        %1410 = vmatprep.subr.bf16.mxu0 0
        %1411 = vmatpush2.bf16.msra.mxu0 0
        %1412 = vmatprep.mubr.bf16.mxu0 0
        %1413 = vmatmul.mubr.bf16.gmra.mxu0 %v1375
        %v1414 = vpop.f32.mrf.mxu0
        %v1415 = vadd.f32 0.0, %v1414
        %v1416 = vpop.f32.mrf.mxu0
        %v1417 = vpop.f32.mrf.mxu0
        %v1418 = vpop.f32.mrf.mxu0
        %1419 = vdwg.mxu0
        %1421 = vrot.lane.b32.xlu0 %v1193, 8
        %v1422 = vpop.permute.xlu0 %1421
        %1425 = vrot.lane.b32.xlu0 %v1304, 16
        %v1426 = vpop.permute.xlu0 %1425
        %1429 = vrot.lane.b32.xlu0 %v1415, 24
        %v1430 = vpop.permute.xlu0 %1429
        %v1432 = vsel %vm518, %v1082, %v1422
        %v1433 = vsel %vm973, %v1432, %v1426
        %v1434 = vsel %vm975, %v1433, %v1430
        %v1435 = vpack.c.bf16 %v1434, %v976
        %v1436 = vld [vmem:[%s3] sm:$0xf]
        %v1437 = vld [vmem:[%s3 + $0x4] sm:$0xf]
        %v1438 = vld [vmem:[%s3 + $0x8] sm:$0xf]
        %v1439 = vld [vmem:[%s3 + $0xc] sm:$0xf]
        %v1440 = vld [vmem:[%s4] sm:$0x1]
        %v1442 = vlaneseq
        %v1443 = vshrl.u32 %v1442, 7
        %v1444 = vsub.s32 0, %v1443
        %v1445 = vrot.slane %v1440, %v1444
        %v1451 = vunpack.c.l.b16 %v1436
        %v1452 = vunpack.c.l.b16 %v1437
        %v1453 = vunpack.c.l.b16 %v1438
        %v1454 = vunpack.c.l.b16 %v1439
        %v1455 = vpack.c.b16 %v1452, %v1451
        %v1456 = vpack.c.b16 %v1454, %v1453
        %v1460 = vsel %vm469, %v1435, 0
        %1462 = vmatprep.subr.bf16.mxu0 0
        %1463 = vmatpush1.bf16.msra.mxu0 0
        %1464 = vmatprep.subr.bf16.mxu0 0
        %1465 = vmatpush1.bf16.msra.mxu0 0
        %1466 = vmatprep.subr.bf16.mxu0 0
        %1467 = vmatpush1.bf16.msra.mxu0 0
        %1468 = vmatprep.subr.bf16.mxu0 0
        %1469 = vmatpush1.bf16.msra.mxu0 0
        %1470 = vmatprep.subr.bf16.mxu0 0
        %1471 = vmatpush1.bf16.msra.mxu0 0
        %1472 = vmatprep.subr.bf16.mxu0 0
        %1473 = vmatpush1.bf16.msra.mxu0 0
        %1474 = vmatprep.subr.bf16.mxu0 0
        %1475 = vmatpush1.bf16.msra.mxu0 %v1456
        %1476 = vmatprep.subr.bf16.mxu0 0
        %1477 = vmatpush1.bf16.msra.mxu0 %v1455
        %1478 = vmatprep.subr.bf16.mxu0 0
        %1479 = vmatpush2.bf16.msra.mxu0 0
        %1480 = vmatprep.subr.bf16.mxu0 0
        %1481 = vmatpush2.bf16.msra.mxu0 0
        %1482 = vmatprep.subr.bf16.mxu0 0
        %1483 = vmatpush2.bf16.msra.mxu0 0
        %1484 = vmatprep.subr.bf16.mxu0 0
        %1485 = vmatpush2.bf16.msra.mxu0 0
        %1486 = vmatprep.subr.bf16.mxu0 0
        %1487 = vmatpush2.bf16.msra.mxu0 0
        %1488 = vmatprep.subr.bf16.mxu0 0
        %1489 = vmatpush2.bf16.msra.mxu0 0
        %1490 = vmatprep.subr.bf16.mxu0 0
        %1491 = vmatpush2.bf16.msra.mxu0 0
        %1492 = vmatprep.subr.bf16.mxu0 0
        %1493 = vmatpush2.bf16.msra.mxu0 0
        %1494 = vmatprep.mubr.bf16.mxu0 0
        %1495 = vmatmul.mubr.bf16.gmra.mxu0 %v1460
        %v1496 = vpop.f32.mrf.mxu0
        %v1497 = vadd.f32 %v1445, %v1496
        %v1498 = vpop.f32.mrf.mxu0
        %v1499 = vpop.f32.mrf.mxu0
        %v1500 = vadd.f32 %v1445, %v1499
        %v1501 = vpop.f32.mrf.mxu0
        %1502 = vdwg.mxu0
        %v1503 = vadd.f32 %v443, %v1497
        %v1504 = vadd.f32 %v444, %v1500
        %v1505 = vld [vmem:[%s5] sm:$0x1]
        %v1506 = vld [vmem:[%s6] sm:$0x1]
        %v1507 = vsel %vm469, %v1503, 0.0
        %1508 = vadd.xlane.f32.xlu0 %v1507
        %v1509 = vpop.xlane.xlu0 %1508
        %v1510 = vsel %vm469, %v1504, 0.0
        %1511 = vadd.xlane.f32.xlu0 %v1510
        %v1512 = vpop.xlane.xlu0 %1511
        %v1513 = vrcp.pop 32.0
        %v1514 = vmul.f32 %v1509, %v1513
        %v1515 = vmul.f32 %v1512, %v1513
        %v1516 = vsub.f32 %v1503, %v1514
        %v1517 = vsub.f32 %v1504, %v1515
        %v1518 = vmul.f32 %v1516, %v1516
        %v1519 = vmul.f32 %v1517, %v1517
        %v1520 = vsel %vm469, %v1518, 0.0
        %1521 = vadd.xlane.f32.xlu0 %v1520
        %v1522 = vpop.xlane.xlu0 %1521
        %v1523 = vsel %vm469, %v1519, 0.0
        %1524 = vadd.xlane.f32.xlu0 %v1523
        %v1525 = vpop.xlane.xlu0 %1524
        %v1526 = vmul.f32 %v1522, %v1513
        %v1527 = vmul.f32 %v1525, %v1513
        %v1528 = vadd.f32 %v1526, 1e-05
        %v1529 = vadd.f32 %v1527, 1e-05
        %v1530 = vrsqrt.pop %v1528
        %v1531 = vrsqrt.pop %v1529
        %v1532 = vmul.f32 %v1516, %v1530
        %v1533 = vmul.f32 %v1517, %v1531
        %v1535 = vlaneseq
        %v1536 = vshrl.u32 %v1535, 7
        %v1537 = vsub.s32 0, %v1536
        %v1538 = vrot.slane %v1505, %v1537
        %v1540 = vmul.f32 %v1532, %v1538
        %v1541 = vmul.f32 %v1533, %v1538
        %v1543 = vlaneseq
        %v1544 = vshrl.u32 %v1543, 7
        %v1545 = vsub.s32 0, %v1544
        %v1546 = vrot.slane %v1506, %v1545
        %v1548 = vadd.f32 %v1540, %v1546
        %v1549 = vadd.f32 %v1541, %v1546
        %v1550 = vpack.c.bf16 %v1549, %v1548
        %v1551 = vld [vmem:[%s7] sm:$0xf]
        %v1552 = vld [vmem:[%s7 + $0x4] sm:$0xf]
        %v1553 = vld [vmem:[%s7 + $0x8] sm:$0xf]
        %v1554 = vld [vmem:[%s7 + $0xc] sm:$0xf]
        %v1555 = vld [vmem:[%s8] sm:$0x1]
        %v1557 = vlaneseq
        %v1558 = vshrl.u32 %v1557, 7
        %v1559 = vsub.s32 0, %v1558
        %v1560 = vrot.slane %v1555, %v1559
        %v1566 = vunpack.c.l.b16 %v1551
        %v1567 = vunpack.c.l.b16 %v1552
        %v1568 = vunpack.c.l.b16 %v1553
        %v1569 = vunpack.c.l.b16 %v1554
        %v1570 = vpack.c.b16 %v1567, %v1566
        %v1571 = vpack.c.b16 %v1569, %v1568
        %v1575 = vsel %vm469, %v1550, 0
        %1577 = vmatprep.subr.bf16.mxu0 0
        %1578 = vmatpush1.bf16.msra.mxu0 0
        %1579 = vmatprep.subr.bf16.mxu0 0
        %1580 = vmatpush1.bf16.msra.mxu0 0
        %1581 = vmatprep.subr.bf16.mxu0 0
        %1582 = vmatpush1.bf16.msra.mxu0 0
        %1583 = vmatprep.subr.bf16.mxu0 0
        %1584 = vmatpush1.bf16.msra.mxu0 0
        %1585 = vmatprep.subr.bf16.mxu0 0
        %1586 = vmatpush1.bf16.msra.mxu0 0
        %1587 = vmatprep.subr.bf16.mxu0 0
        %1588 = vmatpush1.bf16.msra.mxu0 0
        %1589 = vmatprep.subr.bf16.mxu0 0
        %1590 = vmatpush1.bf16.msra.mxu0 %v1571
        %1591 = vmatprep.subr.bf16.mxu0 0
        %1592 = vmatpush1.bf16.msra.mxu0 %v1570
        %1593 = vmatprep.subr.bf16.mxu0 0
        %1594 = vmatpush2.bf16.msra.mxu0 0
        %1595 = vmatprep.subr.bf16.mxu0 0
        %1596 = vmatpush2.bf16.msra.mxu0 0
        %1597 = vmatprep.subr.bf16.mxu0 0
        %1598 = vmatpush2.bf16.msra.mxu0 0
        %1599 = vmatprep.subr.bf16.mxu0 0
        %1600 = vmatpush2.bf16.msra.mxu0 0
        %1601 = vmatprep.subr.bf16.mxu0 0
        %1602 = vmatpush2.bf16.msra.mxu0 0
        %1603 = vmatprep.subr.bf16.mxu0 0
        %1604 = vmatpush2.bf16.msra.mxu0 0
        %1605 = vmatprep.subr.bf16.mxu0 0
        %1606 = vmatpush2.bf16.msra.mxu0 0
        %1607 = vmatprep.subr.bf16.mxu0 0
        %1608 = vmatpush2.bf16.msra.mxu0 0
        %1609 = vmatprep.mubr.bf16.mxu0 0
        %1610 = vmatmul.mubr.bf16.gmra.mxu0 %v1575
        %v1611 = vpop.f32.mrf.mxu0
        %v1612 = vadd.f32 %v1560, %v1611
        %v1613 = vpop.f32.mrf.mxu0
        %v1614 = vpop.f32.mrf.mxu0
        %v1615 = vadd.f32 %v1560, %v1614
        %v1616 = vpop.f32.mrf.mxu0
        %1617 = vdwg.mxu0
        %v1618 = vmax.f32 %v1612, 0.0
        %v1619 = vmax.f32 %v1615, 0.0
        %v1620 = vpack.c.bf16 %v1619, %v1618
        %v1621 = vld [vmem:[%s9] sm:$0xf]
        %v1622 = vld [vmem:[%s9 + $0x4] sm:$0xf]
        %v1623 = vld [vmem:[%s9 + $0x8] sm:$0xf]
        %v1624 = vld [vmem:[%s9 + $0xc] sm:$0xf]
        %v1625 = vld [vmem:[%s9 + $0x10] sm:$0xf]
        %v1626 = vld [vmem:[%s9 + $0x14] sm:$0xf]
        %v1627 = vld [vmem:[%s9 + $0x18] sm:$0xf]
        %v1628 = vld [vmem:[%s9 + $0x1c] sm:$0xf]
        %v1629 = vld [vmem:[%s9 + $0x20] sm:$0xf]
        %v1630 = vld [vmem:[%s9 + $0x24] sm:$0xf]
        %v1631 = vld [vmem:[%s9 + $0x28] sm:$0xf]
        %v1632 = vld [vmem:[%s9 + $0x2c] sm:$0xf]
        %v1633 = vld [vmem:[%s9 + $0x30] sm:$0xf]
        %v1634 = vld [vmem:[%s9 + $0x34] sm:$0xf]
        %v1635 = vld [vmem:[%s9 + $0x38] sm:$0xf]
        %v1636 = vld [vmem:[%s9 + $0x3c] sm:$0xf]
        %v1637 = vld [vmem:[%s10] sm:$0x1]
        %v1639 = vlaneseq
        %v1640 = vshrl.u32 %v1639, 7
        %v1641 = vsub.s32 0, %v1640
        %v1642 = vrot.slane %v1637, %v1641
        %v1660 = vunpack.c.l.b16 %v1621
        %v1661 = vunpack.c.l.b16 %v1622
        %v1662 = vunpack.c.l.b16 %v1623
        %v1663 = vunpack.c.l.b16 %v1624
        %v1664 = vunpack.c.l.b16 %v1625
        %v1665 = vunpack.c.l.b16 %v1626
        %v1666 = vunpack.c.l.b16 %v1627
        %v1667 = vunpack.c.l.b16 %v1628
        %v1668 = vunpack.c.l.b16 %v1629
        %v1669 = vunpack.c.l.b16 %v1630
        %v1670 = vunpack.c.l.b16 %v1631
        %v1671 = vunpack.c.l.b16 %v1632
        %v1672 = vunpack.c.l.b16 %v1633
        %v1673 = vunpack.c.l.b16 %v1634
        %v1674 = vunpack.c.l.b16 %v1635
        %v1675 = vunpack.c.l.b16 %v1636
        %v1676 = vpack.c.b16 %v1661, %v1660
        %v1677 = vpack.c.b16 %v1663, %v1662
        %v1678 = vpack.c.b16 %v1665, %v1664
        %v1679 = vpack.c.b16 %v1667, %v1666
        %v1680 = vpack.c.b16 %v1669, %v1668
        %v1681 = vpack.c.b16 %v1671, %v1670
        %v1682 = vpack.c.b16 %v1673, %v1672
        %v1683 = vpack.c.b16 %v1675, %v1674
        %1692 = vmatprep.subr.bf16.mxu0 0
        %1693 = vmatpush1.bf16.msra.mxu0 %v1683
        %1694 = vmatprep.subr.bf16.mxu0 0
        %1695 = vmatpush1.bf16.msra.mxu0 %v1682
        %1696 = vmatprep.subr.bf16.mxu0 0
        %1697 = vmatpush1.bf16.msra.mxu0 %v1681
        %1698 = vmatprep.subr.bf16.mxu0 0
        %1699 = vmatpush1.bf16.msra.mxu0 %v1680
        %1700 = vmatprep.subr.bf16.mxu0 0
        %1701 = vmatpush1.bf16.msra.mxu0 %v1679
        %1702 = vmatprep.subr.bf16.mxu0 0
        %1703 = vmatpush1.bf16.msra.mxu0 %v1678
        %1704 = vmatprep.subr.bf16.mxu0 0
        %1705 = vmatpush1.bf16.msra.mxu0 %v1677
        %1706 = vmatprep.subr.bf16.mxu0 0
        %1707 = vmatpush1.bf16.msra.mxu0 %v1676
        %1708 = vmatprep.subr.bf16.mxu0 0
        %1709 = vmatpush2.bf16.msra.mxu0 0
        %1710 = vmatprep.subr.bf16.mxu0 0
        %1711 = vmatpush2.bf16.msra.mxu0 0
        %1712 = vmatprep.subr.bf16.mxu0 0
        %1713 = vmatpush2.bf16.msra.mxu0 0
        %1714 = vmatprep.subr.bf16.mxu0 0
        %1715 = vmatpush2.bf16.msra.mxu0 0
        %1716 = vmatprep.subr.bf16.mxu0 0
        %1717 = vmatpush2.bf16.msra.mxu0 0
        %1718 = vmatprep.subr.bf16.mxu0 0
        %1719 = vmatpush2.bf16.msra.mxu0 0
        %1720 = vmatprep.subr.bf16.mxu0 0
        %1721 = vmatpush2.bf16.msra.mxu0 0
        %1722 = vmatprep.subr.bf16.mxu0 0
        %1723 = vmatpush2.bf16.msra.mxu0 0
        %1724 = vmatprep.mubr.bf16.mxu0 0
        %1725 = vmatmul.mubr.bf16.gmra.mxu0 %v1620
        %v1726 = vpop.f32.mrf.mxu0
        %v1727 = vadd.f32 %v1642, %v1726
        %v1728 = vpop.f32.mrf.mxu0
        %v1729 = vpop.f32.mrf.mxu0
        %v1730 = vadd.f32 %v1642, %v1729
        %v1731 = vpop.f32.mrf.mxu0
        %1732 = vdwg.mxu0
        %v1733 = vadd.f32 %v1548, %v1727
        %v1734 = vadd.f32 %v1549, %v1730
        %v1735 = vld [vmem:[%s11] sm:$0x1]
        %v1736 = vld [vmem:[%s12] sm:$0x1]
        %v1737 = vsel %vm469, %v1733, 0.0
        %1738 = vadd.xlane.f32.xlu0 %v1737
        %v1739 = vpop.xlane.xlu0 %1738
        %v1740 = vsel %vm469, %v1734, 0.0
        %1741 = vadd.xlane.f32.xlu0 %v1740
        %v1742 = vpop.xlane.xlu0 %1741
        %v1743 = vmul.f32 %v1739, %v1513
        %v1744 = vmul.f32 %v1742, %v1513
        %v1745 = vsub.f32 %v1733, %v1743
        %v1746 = vsub.f32 %v1734, %v1744
        %v1747 = vmul.f32 %v1745, %v1745
        %v1748 = vmul.f32 %v1746, %v1746
        %v1749 = vsel %vm469, %v1747, 0.0
        %1750 = vadd.xlane.f32.xlu0 %v1749
        %v1751 = vpop.xlane.xlu0 %1750
        %v1752 = vsel %vm469, %v1748, 0.0
        %1753 = vadd.xlane.f32.xlu0 %v1752
        %v1754 = vpop.xlane.xlu0 %1753
        %v1755 = vmul.f32 %v1751, %v1513
        %v1756 = vmul.f32 %v1754, %v1513
        %v1757 = vadd.f32 %v1755, 1e-05
        %v1758 = vadd.f32 %v1756, 1e-05
        %v1759 = vrsqrt.pop %v1757
        %v1760 = vrsqrt.pop %v1758
        %v1761 = vmul.f32 %v1745, %v1759
        %v1762 = vmul.f32 %v1746, %v1760
        %v1764 = vlaneseq
        %v1765 = vshrl.u32 %v1764, 7
        %v1766 = vsub.s32 0, %v1765
        %v1767 = vrot.slane %v1735, %v1766
        %v1769 = vmul.f32 %v1761, %v1767
        %v1770 = vmul.f32 %v1762, %v1767
        %v1772 = vlaneseq
        %v1773 = vshrl.u32 %v1772, 7
        %v1774 = vsub.s32 0, %v1773
        %v1775 = vrot.slane %v1736, %v1774
        %v1777 = vadd.f32 %v1769, %v1775
        %v1778 = vadd.f32 %v1770, %v1775
        %1779 = vst.msk [vmem:[%s434] sm:$0xff] %vm469, %v1777
        %1780 = vst.msk [vmem:[%s434 + $0x8] sm:$0xff] %vm469, %v1778
        %s1781 = sand.u32 %s313, 1
        %s1782 = scalar_lea.sflag [#allocation3], %s1781
        %s1783 = sand.u32 %s313, 1
        %s1784 = smul.addr %s1783, 16
        %s1785 = scalar_lea.vmem [#allocation2], %s1784
        // Predicated region
        $region73: #{spiking_transformer_block.1} parent=71 // pred_check
          %p1786 = pneg %p323
        $region74: #{spiking_transformer_block.1} parent=71 // pred_check_branch
          %1788 = sbr.rel (%p1786) target = $region76
        $region75: #{spiking_transformer_block.1} parent=71 // pred_region
          %s1789 = smul.u32 2, %s27
          %s1791 = ssub.s32 256, 256
          %1792 = vsyncadd %s1782, %s1791
          %s1793 = smul.addr %s1789, 128
          %s1794 = scalar_lea.hbm %s13, %s1793
          %s1795 = sshll.u32 %s1785, 4
          %s1796 = int_to_ptr.vmem [resolvable:$true] %s1795
          %1801 = dma.vmem_to_hbm [thread:$0]  %s1796, 256, %s1794, %s1782, 128, 128, 8
        $region76: #{spiking_transformer_block.1} parent=71 // pred_fallthru
          _
      $region72: #{spiking_transformer_block.1} parent=5 // pred_fallthru
        _
      %p1802 = scmp.le.s32.totalorder 2, %s22
      // Predicated region
      $region77: #{spiking_transformer_block.1} parent=5 // pred_check
        %p1803 = pneg %p1802
      $region78: #{spiking_transformer_block.1} parent=5 // pred_check_branch
        %1805 = sbr.rel (%p1803) target = $region80
      $region79: #{spiking_transformer_block.1} parent=5 // pred_region
        %s1806 = ssub.s32 %s22, 2
        // Predicated region
        $region81: #{spiking_transformer_block.1} parent=79 // pred_check
          %p1807 = pneg %p329
        $region82: #{spiking_transformer_block.1} parent=79 // pred_check_branch
          %1809 = sbr.rel (%p1807) target = $region84
        $region83: #{spiking_transformer_block.1} parent=79 // pred_region
          %s1810 = sand.u32 %s314, 1
          %s1811 = scalar_lea.sflag [#allocation3], %s1810
          %s1812 = sand.u32 %s314, 1
          %s1813 = smul.addr %s1812, 16
          %s1814 = scalar_lea.vmem [#allocation2], %s1813
          %1815 = dma.done %s1811, 256
        $region84: #{spiking_transformer_block.1} parent=79 // pred_fallthru
          _
      $region80: #{spiking_transformer_block.1} parent=5 // pred_fallthru
        _
    $region6: #{spiking_transformer_block.1} parent=1 // loop_footer
      %s26 = sadd.s32 1, %s22
    $region7: #{spiking_transformer_block.1} parent=1 // loop_footer_branch
      %21 = sbr.rel target = $region3
    $region8: #{spiking_transformer_block.1} parent=1 // loop_exit
      _
    %1816 = vsyncpa [#allocation3], 1
    %s1817 = scalar_lea.sflag [#allocation3], 1
    %1818 = vsyncpa %s1817, 1

</llo_original>
